<compile_context>
chip_gen: v6e
topology: v6e:2x2x1
jax: 0.10.0
libtpu: 0.0.40
codegen_flags: <defaults>
</compile_context>

<pallas_src>
import jax
import jax.numpy as jnp
from jax.experimental import pallas as pl
from jax.experimental.pallas import tpu as pltpu


def _round_up(a, b):
    return ((a + b - 1) // b) * b


def _default_matmul_dtype():
    """bf16 MXU operands on v6e/v7x; f32 on v5e and older generations."""
    try:
        kind = jax.devices()[0].device_kind.lower()
    except Exception:
        return jnp.float32
    if any(t in kind for t in ("v2", "v3", "v4", "v5")):
        return jnp.float32
    return jnp.bfloat16


def _choose_pack(dx, dh, max_weight_bytes=8 << 20):
    """How many state rows to pack into one lane-dense row (<=128 lanes)."""
    if 128 % dx != 0:
        return 1
    p = 128 // dx

    def wbytes(q):
        return 4 * q * q * (dx * dh + dh * dh + dh * dx)

    # Keep the (VMEM-resident) expanded weights comfortably small.
    while p > 1 and wbytes(p) > max_weight_bytes:
        p //= 2
    return p


def _expand_params(params, p, matmul_dtype):
    """Block-diagonal weight expansion so packed rows stay independent."""
    w1, b1, w2, b2, w3, b3 = params
    if p == 1:
        ws = (w1, w2, w3)
        bs = (b1, b2, b3)
    else:
        eye = jnp.eye(p, dtype=w1.dtype)
        ws = tuple(jnp.kron(eye, w) for w in (w1, w2, w3))
        bs = tuple(jnp.tile(b, (1, p)) for b in (b1, b2, b3))
    ws = tuple(w.astype(matmul_dtype) for w in ws)          # MXU operand dtype
    bs = tuple(b.astype(jnp.float32) for b in bs)           # bias adds stay f32
    return ws[0], bs[0], ws[1], bs[1], ws[2], bs[2]


def _rnn_dynamics_kernel(x_ref, w1_ref, b1_ref, w2_ref, b2_ref,
                         w3_ref, b3_ref, o_ref):
    x = x_ref[...]                                           # (tm, p*dx) f32
    xm = x.astype(w1_ref.dtype)                              # MXU operand dtype
    h = jnp.tanh(
        jnp.dot(xm, w1_ref[...], preferred_element_type=jnp.float32)
        + b1_ref[...])                                       # (tm, p*dh) f32
    h = jnp.tanh(
        jnp.dot(h.astype(w2_ref.dtype), w2_ref[...],
                preferred_element_type=jnp.float32)
        + b2_ref[...])                                       # (tm, p*dh) f32
    mu = (jnp.dot(h.astype(w3_ref.dtype), w3_ref[...],
                  preferred_element_type=jnp.float32)
          + b3_ref[...])                                     # (tm, p*dx) f32
    o_ref[...] = (mu + x).astype(o_ref.dtype)                # residual, f32


def rnn_dynamics_forward(x, params, *, matmul_dtype=None):
    """x: (..., dx). Returns mu with the same shape and dtype."""
    w1 = params[0]
    dx = x.shape[-1]
    dh = w1.shape[1]
    assert w1.shape[0] == dx
    lead_shape = x.shape[:-1]
    in_dtype = x.dtype

    if matmul_dtype is None:
        matmul_dtype = _default_matmul_dtype()

    x2d = x.reshape(-1, dx).astype(jnp.float32)
    n = x2d.shape[0]

    p = _choose_pack(dx, dh)
    ld = p * dx                                  # lane width of the dense slab
    dhe = p * dh

    # Rows of the lane-dense slab.
    nr = pl.cdiv(n, p)
    # Row tile (in dense-slab rows): one fat step for small inputs, otherwise
    # balanced 8-aligned steps of ~1024 rows (megacore on v7x, negligible
    # padding waste, double-buffered tiles well under the VMEM limit).
    if nr <= 512:
        tm = _round_up(nr, 8)
    else:
        n_steps = max(2, pl.cdiv(nr, 1024))
        tm = _round_up(pl.cdiv(nr, n_steps), 8)
    nr_pad = _round_up(nr, tm)
    n_pad = nr_pad * p

    if n_pad != n:
        x2d = jnp.pad(x2d, ((0, n_pad - n), (0, 0)))
    xd = x2d.reshape(nr_pad, ld)                 # lane-dense input slab

    w1e, b1e, w2e, b2e, w3e, b3e = _expand_params(params, p, matmul_dtype)

    grid = (nr_pad // tm,)
    # Constant index_map => block never changes => DMAed once, VMEM-resident.
    const = lambda r, c: pl.BlockSpec((r, c), lambda i: (0, 0))

    outd = pl.pallas_call(
        _rnn_dynamics_kernel,
        out_shape=jax.ShapeDtypeStruct((nr_pad, ld), jnp.float32),
        grid_spec=pltpu.PrefetchScalarGridSpec(
            num_scalar_prefetch=0,
            grid=grid,
            in_specs=[
                pl.BlockSpec((tm, ld), lambda i: (i, 0)),   # x tile (lane-dense)
                const(ld, dhe),                             # W1 (block-diag)
                const(1, dhe),                              # b1
                const(dhe, dhe),                            # W2 (block-diag)
                const(1, dhe),                              # b2
                const(dhe, ld),                             # W3 (block-diag)
                const(1, ld),                               # b3
            ],
            out_specs=pl.BlockSpec((tm, ld), lambda i: (i, 0)),
        ),
        compiler_params=pltpu.CompilerParams(
            dimension_semantics=("parallel",)),
    )(xd, w1e, b1e, w2e, b2e, w3e, b3e)

    out = outd.reshape(nr_pad * p, dx)[:n]
    return out.reshape(*lead_shape, dx).astype(in_dtype)


def init_params(key, dx, dh):
    """Deterministic synthetic parameters (shapes match the nn.Linear layers)."""
    ks = jax.random.split(key, 6)
    scale1 = 1.0 / jnp.sqrt(dx)
    scale2 = 1.0 / jnp.sqrt(dh)
    w1 = jax.random.uniform(ks[0], (dx, dh), jnp.float32, -scale1, scale1)
    b1 = jax.random.uniform(ks[1], (1, dh), jnp.float32, -scale1, scale1)
    w2 = jax.random.uniform(ks[2], (dh, dh), jnp.float32, -scale2, scale2)
    b2 = jax.random.uniform(ks[3], (1, dh), jnp.float32, -scale2, scale2)
    w3 = jax.random.uniform(ks[4], (dh, dx), jnp.float32, -scale2, scale2)
    b3 = jax.random.uniform(ks[5], (1, dx), jnp.float32, -scale2, scale2)
    return (w1, b1, w2, b2, w3, b3)


def _reference_forward(x, params, matmul_dtype=jnp.float32):
    """Pure-JAX reference, mirroring the kernel's matmul operand dtype."""
    w1, b1, w2, b2, w3, b3 = params

    def mm(a, w):
        return jnp.dot(a.astype(matmul_dtype), w.astype(matmul_dtype),
                       preferred_element_type=jnp.float32)

    h = jnp.tanh(mm(x, w1) + b1)
    h = jnp.tanh(mm(h, w2) + b2)
    return mm(h, w3) + b3 + x


if __name__ == "__main__":
    dx, dh = 8, 32
    batch, seq = 2, 8

    key = jax.random.PRNGKey(0)
    kx, kp = jax.random.split(key)
    x_prev = jax.random.normal(kx, (batch, seq, dx), dtype=jnp.float32)
    params = init_params(kp, dx, dh)

    # (the module also owns a `logvar` parameter used for var in compute_param;
    #  forward() only returns mu, so it is not needed in the hot path)
    # TODO(synk): sample_forward / _compute_log_prob paths (Gaussian sampling
    # and Normal.log_prob) are not part of forward() and are left unimplemented.

    md = _default_matmul_dtype()
    mu = rnn_dynamics_forward(x_prev, params, matmul_dtype=md)
    mu = jax.block_until_ready(mu)

    ref = _reference_forward(x_prev, params, matmul_dtype=md)
    tol = 1e-5 if md == jnp.float32 else 1e-3
    assert mu.shape == x_prev.shape
    assert jnp.allclose(mu, ref, atol=tol, rtol=tol), \
        float(jnp.max(jnp.abs(mu - ref)))

    print("KERNEL_OK")
</pallas_src>

<mosaic_0001>
module attributes {stable_mosaic.version = 11 : i64} {
  func.func @_rnn_dynamics_kernel(%arg0: i32, %arg1: memref<8x128xf32, #tpu.memory_space<vmem>>, %arg2: memref<128x512xbf16, #tpu.memory_space<vmem>>, %arg3: memref<1x512xf32, #tpu.memory_space<vmem>>, %arg4: memref<512x512xbf16, #tpu.memory_space<vmem>>, %arg5: memref<1x512xf32, #tpu.memory_space<vmem>>, %arg6: memref<512x128xbf16, #tpu.memory_space<vmem>>, %arg7: memref<1x128xf32, #tpu.memory_space<vmem>>, %arg8: memref<8x128xf32, #tpu.memory_space<vmem>>) attributes {dimension_semantics = [#tpu.dimension_semantics<parallel>], iteration_bounds = array<i64: 1>, scalar_prefetch = 0 : i64, scratch_operands = 0 : i64, tpu.core_type = #tpu.core_type<tc>, window_params = [{transform_indices = @transform_0, window_bounds = array<i64: 8, 128>}, {pipeline_mode = #tpu.pipeline_mode<synchronous>, transform_indices = @transform_1, window_bounds = array<i64: 128, 512>}, {pipeline_mode = #tpu.pipeline_mode<synchronous>, transform_indices = @transform_2, window_bounds = array<i64: 1, 512>}, {pipeline_mode = #tpu.pipeline_mode<synchronous>, transform_indices = @transform_3, window_bounds = array<i64: 512, 512>}, {pipeline_mode = #tpu.pipeline_mode<synchronous>, transform_indices = @transform_4, window_bounds = array<i64: 1, 512>}, {pipeline_mode = #tpu.pipeline_mode<synchronous>, transform_indices = @transform_5, window_bounds = array<i64: 512, 128>}, {pipeline_mode = #tpu.pipeline_mode<synchronous>, transform_indices = @transform_6, window_bounds = array<i64: 1, 128>}, {transform_indices = @transform_7, window_bounds = array<i64: 8, 128>}]} {
    %c0 = arith.constant 0 : index
    %c0_0 = arith.constant 0 : index
    %0 = vector.load %arg1[%c0, %c0_0] : memref<8x128xf32, #tpu.memory_space<vmem>>, vector<8x128xf32>
    %1 = arith.truncf %0 : vector<8x128xf32> to vector<8x128xbf16>
    %c0_1 = arith.constant 0 : index
    %c0_2 = arith.constant 0 : index
    %2 = vector.load %arg2[%c0_1, %c0_2] : memref<128x512xbf16, #tpu.memory_space<vmem>>, vector<128x512xbf16>
    %cst = arith.constant dense<0.000000e+00> : vector<8x512xf32>
    %3 = tpu.matmul %1, %2, %cst {dimension_numbers = #tpu.dot_dimension_numbers<[1], [0], [0], [1], [0, 0, 1, 1], [], []>} : vector<8x128xbf16>, vector<128x512xbf16>, vector<8x512xf32> -> vector<8x512xf32>
    %c0_3 = arith.constant 0 : index
    %c0_4 = arith.constant 0 : index
    %4 = vector.load %arg3[%c0_3, %c0_4] : memref<1x512xf32, #tpu.memory_space<vmem>>, vector<1x512xf32>
    %5 = vector.broadcast %4 : vector<1x512xf32> to vector<8x512xf32>
    %6 = arith.addf %3, %5 : vector<8x512xf32>
    %7 = math.tanh %6 : vector<8x512xf32>
    %8 = arith.truncf %7 : vector<8x512xf32> to vector<8x512xbf16>
    %c0_5 = arith.constant 0 : index
    %c0_6 = arith.constant 0 : index
    %9 = vector.load %arg4[%c0_5, %c0_6] : memref<512x512xbf16, #tpu.memory_space<vmem>>, vector<512x512xbf16>
    %cst_7 = arith.constant dense<0.000000e+00> : vector<8x512xf32>
    %10 = tpu.matmul %8, %9, %cst_7 {dimension_numbers = #tpu.dot_dimension_numbers<[1], [0], [0], [1], [0, 0, 1, 1], [], []>} : vector<8x512xbf16>, vector<512x512xbf16>, vector<8x512xf32> -> vector<8x512xf32>
    %c0_8 = arith.constant 0 : index
    %c0_9 = arith.constant 0 : index
    %11 = vector.load %arg5[%c0_8, %c0_9] : memref<1x512xf32, #tpu.memory_space<vmem>>, vector<1x512xf32>
    %12 = vector.broadcast %11 : vector<1x512xf32> to vector<8x512xf32>
    %13 = arith.addf %10, %12 : vector<8x512xf32>
    %14 = math.tanh %13 : vector<8x512xf32>
    %15 = arith.truncf %14 : vector<8x512xf32> to vector<8x512xbf16>
    %c0_10 = arith.constant 0 : index
    %c0_11 = arith.constant 0 : index
    %16 = vector.load %arg6[%c0_10, %c0_11] : memref<512x128xbf16, #tpu.memory_space<vmem>>, vector<512x128xbf16>
    %cst_12 = arith.constant dense<0.000000e+00> : vector<8x128xf32>
    %17 = tpu.matmul %15, %16, %cst_12 {dimension_numbers = #tpu.dot_dimension_numbers<[1], [0], [0], [1], [0, 0, 1, 1], [], []>} : vector<8x512xbf16>, vector<512x128xbf16>, vector<8x128xf32> -> vector<8x128xf32>
    %c0_13 = arith.constant 0 : index
    %c0_14 = arith.constant 0 : index
    %18 = vector.load %arg7[%c0_13, %c0_14] : memref<1x128xf32, #tpu.memory_space<vmem>>, vector<1x128xf32>
    %19 = vector.broadcast %18 : vector<1x128xf32> to vector<8x128xf32>
    %20 = arith.addf %17, %19 : vector<8x128xf32>
    %21 = arith.addf %20, %0 : vector<8x128xf32>
    %c0_15 = arith.constant 0 : index
    %c0_16 = arith.constant 0 : index
    %22 = vector.load %arg8[%c0_15, %c0_16] : memref<8x128xf32, #tpu.memory_space<vmem>>, vector<8x128xf32>
    tpu.vector_store %arg8[%c0_15, %c0_16], %21 {strides = array<i32>} : memref<8x128xf32, #tpu.memory_space<vmem>>, vector<8x128xf32>,
    return
  }
  func.func @transform_0(%arg0: i32) -> (i32, i32) {
    %c0_i32 = arith.constant 0 : i32
    %c0_i32_0 = arith.constant 0 : i32
    return %arg0, %c0_i32 : i32, i32
  }
  func.func @transform_1(%arg0: i32) -> (i32, i32) {
    %c0_i32 = arith.constant 0 : i32
    %c0_i32_0 = arith.constant 0 : i32
    %c0_i32_1 = arith.constant 0 : i32
    return %c0_i32, %c0_i32_0 : i32, i32
  }
  func.func @transform_2(%arg0: i32) -> (i32, i32) {
    %c0_i32 = arith.constant 0 : i32
    %c0_i32_0 = arith.constant 0 : i32
    %c0_i32_1 = arith.constant 0 : i32
    return %c0_i32, %c0_i32_0 : i32, i32
  }
  func.func @transform_3(%arg0: i32) -> (i32, i32) {
    %c0_i32 = arith.constant 0 : i32
    %c0_i32_0 = arith.constant 0 : i32
    %c0_i32_1 = arith.constant 0 : i32
    return %c0_i32, %c0_i32_0 : i32, i32
  }
  func.func @transform_4(%arg0: i32) -> (i32, i32) {
    %c0_i32 = arith.constant 0 : i32
    %c0_i32_0 = arith.constant 0 : i32
    %c0_i32_1 = arith.constant 0 : i32
    return %c0_i32, %c0_i32_0 : i32, i32
  }
  func.func @transform_5(%arg0: i32) -> (i32, i32) {
    %c0_i32 = arith.constant 0 : i32
    %c0_i32_0 = arith.constant 0 : i32
    %c0_i32_1 = arith.constant 0 : i32
    return %c0_i32, %c0_i32_0 : i32, i32
  }
  func.func @transform_6(%arg0: i32) -> (i32, i32) {
    %c0_i32 = arith.constant 0 : i32
    %c0_i32_0 = arith.constant 0 : i32
    %c0_i32_1 = arith.constant 0 : i32
    return %c0_i32, %c0_i32_0 : i32, i32
  }
  func.func @transform_7(%arg0: i32) -> (i32, i32) {
    %c0_i32 = arith.constant 0 : i32
    %c0_i32_0 = arith.constant 0 : i32
    return %arg0, %c0_i32 : i32, i32
  }
}

</mosaic_0001>

<llo_original>
// kernel: tpu_custom_call.1
$region0: #{tpu_custom_call.1}
  #allocation0 [shape = 'u32[]', space=smem, size = 0x4, offset = 0x4, fixed_abs, tag = 'smem constant byte address 0x4 - core index']
  #allocation1 [shape = 'u32[144,128]{1,0:T(1,128)}', space=vmem, size = 0x12000, scoped, tag = 'internal scratch']
  %s0 = inlined_call_operand.hbm [shape: f32[8,128], index: 0, kind: input, shape index: {}]
  %s1 = inlined_call_operand.hbm [shape: bf16[128,512], index: 1, kind: input, shape index: {}]
  %s2 = inlined_call_operand.hbm [shape: f32[1,512], index: 2, kind: input, shape index: {}]
  %s3 = inlined_call_operand.hbm [shape: bf16[512,512], index: 3, kind: input, shape index: {}]
  %s4 = inlined_call_operand.vmem [shape: f32[1,512], index: 4, kind: input, shape index: {}]
  %s5 = inlined_call_operand.hbm [shape: bf16[512,128], index: 5, kind: input, shape index: {}]
  %s6 = inlined_call_operand.vmem [shape: f32[1,128], index: 6, kind: input, shape index: {}]
  %s7 = inlined_call_operand.hbm [shape: f32[8,128], index: 7, kind: output, shape index: {}]
  %s8 = sld [smem:[#allocation0]]
  $region58: #{tpu_custom_call.1} parent=0
    _
  %s10 = ssub.s32 1, %s8
  %s11 = scalar_select 0, %s10, %s8
  $region1: #{tpu_custom_call.1} parent=0
    #allocation2 [shape = 'u8[4096]{0}', space=vmem, size = 0x1000, scoped, tag = 'input window, operand 0, single buffered']
    #allocation3 [shape = 's32[1]{0}', space=sflag, size = 0x4, scoped, tag = 'scoped memory for tpu_custom_call.1']
    #allocation4 [shape = 's32[1]{0}', space=sflag, size = 0x4, scoped, tag = 'scoped memory for tpu_custom_call.1']
    #allocation5 [shape = 'u8[131072]{0}', space=vmem, size = 0x20000, scoped, tag = 'input window, operand 1, single buffered']
    #allocation6 [shape = 's32[1]{0}', space=sflag, size = 0x4, scoped, tag = 'scoped memory for tpu_custom_call.1']
    #allocation7 [shape = 'u8[2048]{0}', space=vmem, size = 0x800, scoped, tag = 'input window, operand 2, single buffered']
    #allocation8 [shape = 'u8[524288]{0}', space=vmem, size = 0x80000, scoped, tag = 'input window, operand 3, single buffered']
    #allocation9 [shape = 's32[1]{0}', space=sflag, size = 0x4, scoped, tag = 'scoped memory for tpu_custom_call.1']
    #allocation10 [shape = 'u8[131072]{0}', space=vmem, size = 0x20000, scoped, tag = 'input window, operand 5, single buffered']
    #allocation11 [shape = 'u8[4096]{0}', space=vmem, size = 0x1000, scoped, tag = 'output window, operand 0, single buffered']
    %12 = vsyncpa [#allocation3], 0
    %13 = vsyncpa [#allocation6], 0
    %14 = vsyncpa [#allocation9], 0
    %15 = vsyncpa [#allocation4], 0
    // Predicated region
    $region2: #{tpu_custom_call.1} parent=1 // pred_check
      _
    $region3: #{tpu_custom_call.1} parent=1 // pred_check_branch
      %17 = sbr.rel (0) target = $region5
    $region4: #{tpu_custom_call.1} parent=1 // pred_region
      %s19 = ssub.s32 128, 128
      %20 = vsyncadd [#allocation3], %s19
      %s22 = sshll.u32 [#allocation2], 4
      %s23 = int_to_ptr.vmem [resolvable:$true] %s22
      %25 = dma.hbm_to_vmem [thread:$0]  %s0, 128, %s23, [#allocation3]
    $region5: #{tpu_custom_call.1} parent=1 // pred_fallthru
      _
    // Predicated region
    $region6: #{tpu_custom_call.1} parent=1 // pred_check
      _
    $region7: #{tpu_custom_call.1} parent=1 // pred_check_branch
      %27 = sbr.rel (0) target = $region9
    $region8: #{tpu_custom_call.1} parent=1 // pred_region
      %s29 = ssub.s32 4096, 4096
      %30 = vsyncadd [#allocation6], %s29
      %s31 = sshll.u32 [#allocation5], 4
      %s32 = int_to_ptr.vmem [resolvable:$true] %s31
      %37 = dma.hbm_to_vmem [thread:$0]  %s1, 4096, %s32, [#allocation6], 256, 256, 16
    $region9: #{tpu_custom_call.1} parent=1 // pred_fallthru
      _
    // Predicated region
    $region10: #{tpu_custom_call.1} parent=1 // pred_check
      _
    $region11: #{tpu_custom_call.1} parent=1 // pred_check_branch
      %39 = sbr.rel (0) target = $region13
    $region12: #{tpu_custom_call.1} parent=1 // pred_region
      %s41 = ssub.s32 64, 64
      %42 = vsyncadd [#allocation6], %s41
      %s44 = sshll.u32 [#allocation7], 4
      %s45 = int_to_ptr.vmem [resolvable:$true] %s44
      %47 = dma.hbm_to_vmem [thread:$0]  %s2, 64, %s45, [#allocation6]
    $region13: #{tpu_custom_call.1} parent=1 // pred_fallthru
      _
    // Predicated region
    $region14: #{tpu_custom_call.1} parent=1 // pred_check
      _
    $region15: #{tpu_custom_call.1} parent=1 // pred_check_branch
      %49 = sbr.rel (0) target = $region17
    $region16: #{tpu_custom_call.1} parent=1 // pred_region
      %s51 = ssub.s32 16384, 16384
      %52 = vsyncadd [#allocation9], %s51
      %s53 = sshll.u32 [#allocation8], 4
      %s54 = int_to_ptr.vmem [resolvable:$true] %s53
      %59 = dma.hbm_to_vmem [thread:$0]  %s3, 16384, %s54, [#allocation9], 256, 256, 16
    $region17: #{tpu_custom_call.1} parent=1 // pred_fallthru
      _
    // Predicated region
    $region18: #{tpu_custom_call.1} parent=1 // pred_check
      _
    $region19: #{tpu_custom_call.1} parent=1 // pred_check_branch
      %61 = sbr.rel (0) target = $region21
    $region20: #{tpu_custom_call.1} parent=1 // pred_region
      _
    $region21: #{tpu_custom_call.1} parent=1 // pred_fallthru
      _
    // Predicated region
    $region22: #{tpu_custom_call.1} parent=1 // pred_check
      _
    $region23: #{tpu_custom_call.1} parent=1 // pred_check_branch
      %63 = sbr.rel (0) target = $region25
    $region24: #{tpu_custom_call.1} parent=1 // pred_region
      %s65 = ssub.s32 4096, 4096
      %66 = vsyncadd [#allocation9], %s65
      %s67 = sshll.u32 [#allocation10], 4
      %s68 = int_to_ptr.vmem [resolvable:$true] %s67
      %73 = dma.hbm_to_vmem [thread:$0]  %s5, 4096, %s68, [#allocation9], 64, 64, 4
    $region25: #{tpu_custom_call.1} parent=1 // pred_fallthru
      _
    // Predicated region
    $region26: #{tpu_custom_call.1} parent=1 // pred_check
      _
    $region27: #{tpu_custom_call.1} parent=1 // pred_check_branch
      %75 = sbr.rel (0) target = $region29
    $region28: #{tpu_custom_call.1} parent=1 // pred_region
      _
    $region29: #{tpu_custom_call.1} parent=1 // pred_fallthru
      _
    // Predicated region
    $region30: #{tpu_custom_call.1} parent=1 // pred_check
      _
    $region31: #{tpu_custom_call.1} parent=1 // pred_check_branch
      %77 = sbr.rel (0) target = $region33
    $region32: #{tpu_custom_call.1} parent=1 // pred_region
      %78 = dma.done [#allocation3], 128
    $region33: #{tpu_custom_call.1} parent=1 // pred_fallthru
      _
    // Predicated region
    $region34: #{tpu_custom_call.1} parent=1 // pred_check
      _
    $region35: #{tpu_custom_call.1} parent=1 // pred_check_branch
      %80 = sbr.rel (0) target = $region37
    $region36: #{tpu_custom_call.1} parent=1 // pred_region
      %81 = dma.done [#allocation6], 4096
    $region37: #{tpu_custom_call.1} parent=1 // pred_fallthru
      _
    // Predicated region
    $region38: #{tpu_custom_call.1} parent=1 // pred_check
      _
    $region39: #{tpu_custom_call.1} parent=1 // pred_check_branch
      %83 = sbr.rel (0) target = $region41
    $region40: #{tpu_custom_call.1} parent=1 // pred_region
      %84 = dma.done [#allocation6], 64
    $region41: #{tpu_custom_call.1} parent=1 // pred_fallthru
      _
    // Predicated region
    $region42: #{tpu_custom_call.1} parent=1 // pred_check
      _
    $region43: #{tpu_custom_call.1} parent=1 // pred_check_branch
      %86 = sbr.rel (0) target = $region45
    $region44: #{tpu_custom_call.1} parent=1 // pred_region
      %87 = dma.done [#allocation9], 16384
    $region45: #{tpu_custom_call.1} parent=1 // pred_fallthru
      _
    // Predicated region
    $region46: #{tpu_custom_call.1} parent=1 // pred_check
      _
    $region47: #{tpu_custom_call.1} parent=1 // pred_check_branch
      %89 = sbr.rel (0) target = $region49
    $region48: #{tpu_custom_call.1} parent=1 // pred_region
      %90 = dma.done [#allocation9], 4096
    $region49: #{tpu_custom_call.1} parent=1 // pred_fallthru
      _
    %v92 = vld [vmem:[#allocation2] sm:$0xff]
    %v93 = vpack.c.bf16 %v92, %v92
    %v94 = vld [vmem:[#allocation5] sm:$0xff]
    %v95 = vld [vmem:[#allocation5 + $0x8] sm:$0xff]
    %v96 = vld [vmem:[#allocation5 + $0x10] sm:$0xff]
    %v97 = vld [vmem:[#allocation5 + $0x18] sm:$0xff]
    %v98 = vld [vmem:[#allocation5 + $0x20] sm:$0xff]
    %v99 = vld [vmem:[#allocation5 + $0x28] sm:$0xff]
    %v100 = vld [vmem:[#allocation5 + $0x30] sm:$0xff]
    %v101 = vld [vmem:[#allocation5 + $0x38] sm:$0xff]
    %v102 = vld [vmem:[#allocation5 + $0x40] sm:$0xff]
    %v103 = vld [vmem:[#allocation5 + $0x48] sm:$0xff]
    %v104 = vld [vmem:[#allocation5 + $0x50] sm:$0xff]
    %v105 = vld [vmem:[#allocation5 + $0x58] sm:$0xff]
    %v106 = vld [vmem:[#allocation5 + $0x60] sm:$0xff]
    %v107 = vld [vmem:[#allocation5 + $0x68] sm:$0xff]
    %v108 = vld [vmem:[#allocation5 + $0x70] sm:$0xff]
    %v109 = vld [vmem:[#allocation5 + $0x78] sm:$0xff]
    %v110 = vld [vmem:[#allocation5 + $0x80] sm:$0xff]
    %v111 = vld [vmem:[#allocation5 + $0x88] sm:$0xff]
    %v112 = vld [vmem:[#allocation5 + $0x90] sm:$0xff]
    %v113 = vld [vmem:[#allocation5 + $0x98] sm:$0xff]
    %v114 = vld [vmem:[#allocation5 + $0xa0] sm:$0xff]
    %v115 = vld [vmem:[#allocation5 + $0xa8] sm:$0xff]
    %v116 = vld [vmem:[#allocation5 + $0xb0] sm:$0xff]
    %v117 = vld [vmem:[#allocation5 + $0xb8] sm:$0xff]
    %v118 = vld [vmem:[#allocation5 + $0xc0] sm:$0xff]
    %v119 = vld [vmem:[#allocation5 + $0xc8] sm:$0xff]
    %v120 = vld [vmem:[#allocation5 + $0xd0] sm:$0xff]
    %v121 = vld [vmem:[#allocation5 + $0xd8] sm:$0xff]
    %v122 = vld [vmem:[#allocation5 + $0xe0] sm:$0xff]
    %v123 = vld [vmem:[#allocation5 + $0xe8] sm:$0xff]
    %v124 = vld [vmem:[#allocation5 + $0xf0] sm:$0xff]
    %v125 = vld [vmem:[#allocation5 + $0xf8] sm:$0xff]
    %v126 = vld [vmem:[#allocation7] sm:$0xf]
    %v128 = vlaneseq
    %v129 = vshrl.u32 %v128, 7
    %v130 = vsub.s32 0, %v129
    %v131 = vrot.slane %v126, %v130
    %v132 = vlaneseq
    %v133 = vshrl.u32 %v132, 7
    %v134 = vsub.s32 1, %v133
    %v135 = vrot.slane %v126, %v134
    %v136 = vlaneseq
    %v137 = vshrl.u32 %v136, 7
    %v138 = vsub.s32 2, %v137
    %v139 = vrot.slane %v126, %v138
    %v140 = vlaneseq
    %v141 = vshrl.u32 %v140, 7
    %v142 = vsub.s32 3, %v141
    %v143 = vrot.slane %v126, %v142
    %v180 = vunpack.c.l.b16 %v94
    %v181 = vunpack.c.h.b16 %v94
    %v182 = vunpack.c.l.b16 %v95
    %v183 = vunpack.c.h.b16 %v95
    %v184 = vunpack.c.l.b16 %v96
    %v185 = vunpack.c.h.b16 %v96
    %v186 = vunpack.c.l.b16 %v97
    %v187 = vunpack.c.h.b16 %v97
    %v188 = vunpack.c.l.b16 %v98
    %v189 = vunpack.c.h.b16 %v98
    %v190 = vunpack.c.l.b16 %v99
    %v191 = vunpack.c.h.b16 %v99
    %v192 = vunpack.c.l.b16 %v100
    %v193 = vunpack.c.h.b16 %v100
    %v194 = vunpack.c.l.b16 %v101
    %v195 = vunpack.c.h.b16 %v101
    %v196 = vunpack.c.l.b16 %v102
    %v197 = vunpack.c.h.b16 %v102
    %v198 = vunpack.c.l.b16 %v103
    %v199 = vunpack.c.h.b16 %v103
    %v200 = vunpack.c.l.b16 %v104
    %v201 = vunpack.c.h.b16 %v104
    %v202 = vunpack.c.l.b16 %v105
    %v203 = vunpack.c.h.b16 %v105
    %v204 = vunpack.c.l.b16 %v106
    %v205 = vunpack.c.h.b16 %v106
    %v206 = vunpack.c.l.b16 %v107
    %v207 = vunpack.c.h.b16 %v107
    %v208 = vunpack.c.l.b16 %v108
    %v209 = vunpack.c.h.b16 %v108
    %v210 = vunpack.c.l.b16 %v109
    %v211 = vunpack.c.h.b16 %v109
    %v212 = vunpack.c.l.b16 %v110
    %v213 = vunpack.c.h.b16 %v110
    %v214 = vunpack.c.l.b16 %v111
    %v215 = vunpack.c.h.b16 %v111
    %v216 = vunpack.c.l.b16 %v112
    %v217 = vunpack.c.h.b16 %v112
    %v218 = vunpack.c.l.b16 %v113
    %v219 = vunpack.c.h.b16 %v113
    %v220 = vunpack.c.l.b16 %v114
    %v221 = vunpack.c.h.b16 %v114
    %v222 = vunpack.c.l.b16 %v115
    %v223 = vunpack.c.h.b16 %v115
    %v224 = vunpack.c.l.b16 %v116
    %v225 = vunpack.c.h.b16 %v116
    %v226 = vunpack.c.l.b16 %v117
    %v227 = vunpack.c.h.b16 %v117
    %v228 = vunpack.c.l.b16 %v118
    %v229 = vunpack.c.h.b16 %v118
    %v230 = vunpack.c.l.b16 %v119
    %v231 = vunpack.c.h.b16 %v119
    %v232 = vunpack.c.l.b16 %v120
    %v233 = vunpack.c.h.b16 %v120
    %v234 = vunpack.c.l.b16 %v121
    %v235 = vunpack.c.h.b16 %v121
    %v236 = vunpack.c.l.b16 %v122
    %v237 = vunpack.c.h.b16 %v122
    %v238 = vunpack.c.l.b16 %v123
    %v239 = vunpack.c.h.b16 %v123
    %v240 = vunpack.c.l.b16 %v124
    %v241 = vunpack.c.h.b16 %v124
    %v242 = vunpack.c.l.b16 %v125
    %v243 = vunpack.c.h.b16 %v125
    %v244 = vpack.c.b16 %v184, %v180
    %v245 = vpack.c.b16 %v185, %v181
    %v246 = vpack.c.b16 %v186, %v182
    %v247 = vpack.c.b16 %v187, %v183
    %v248 = vpack.c.b16 %v192, %v188
    %v249 = vpack.c.b16 %v193, %v189
    %v250 = vpack.c.b16 %v194, %v190
    %v251 = vpack.c.b16 %v195, %v191
    %v252 = vpack.c.b16 %v200, %v196
    %v253 = vpack.c.b16 %v201, %v197
    %v254 = vpack.c.b16 %v202, %v198
    %v255 = vpack.c.b16 %v203, %v199
    %v256 = vpack.c.b16 %v208, %v204
    %v257 = vpack.c.b16 %v209, %v205
    %v258 = vpack.c.b16 %v210, %v206
    %v259 = vpack.c.b16 %v211, %v207
    %v260 = vpack.c.b16 %v216, %v212
    %v261 = vpack.c.b16 %v217, %v213
    %v262 = vpack.c.b16 %v218, %v214
    %v263 = vpack.c.b16 %v219, %v215
    %v264 = vpack.c.b16 %v224, %v220
    %v265 = vpack.c.b16 %v225, %v221
    %v266 = vpack.c.b16 %v226, %v222
    %v267 = vpack.c.b16 %v227, %v223
    %v268 = vpack.c.b16 %v232, %v228
    %v269 = vpack.c.b16 %v233, %v229
    %v270 = vpack.c.b16 %v234, %v230
    %v271 = vpack.c.b16 %v235, %v231
    %v272 = vpack.c.b16 %v240, %v236
    %v273 = vpack.c.b16 %v241, %v237
    %v274 = vpack.c.b16 %v242, %v238
    %v275 = vpack.c.b16 %v243, %v239
    %308 = vmatprep.subr.bf16.mxu0 %v273
    %309 = vmatpush1.bf16.msra.mxu0 %v272
    %310 = vmatprep.subr.bf16.mxu0 %v269
    %311 = vmatpush1.bf16.msra.mxu0 %v268
    %312 = vmatprep.subr.bf16.mxu0 %v265
    %313 = vmatpush1.bf16.msra.mxu0 %v264
    %314 = vmatprep.subr.bf16.mxu0 %v261
    %315 = vmatpush1.bf16.msra.mxu0 %v260
    %316 = vmatprep.subr.bf16.mxu0 %v257
    %317 = vmatpush1.bf16.msra.mxu0 %v256
    %318 = vmatprep.subr.bf16.mxu0 %v253
    %319 = vmatpush1.bf16.msra.mxu0 %v252
    %320 = vmatprep.subr.bf16.mxu0 %v249
    %321 = vmatpush1.bf16.msra.mxu0 %v248
    %322 = vmatprep.subr.bf16.mxu0 %v245
    %323 = vmatpush1.bf16.msra.mxu0 %v244
    %324 = vmatprep.subr.bf16.mxu0 0
    %325 = vmatpush2.bf16.msra.mxu0 0
    %326 = vmatprep.subr.bf16.mxu0 0
    %327 = vmatpush2.bf16.msra.mxu0 0
    %328 = vmatprep.subr.bf16.mxu0 0
    %329 = vmatpush2.bf16.msra.mxu0 0
    %330 = vmatprep.subr.bf16.mxu0 0
    %331 = vmatpush2.bf16.msra.mxu0 0
    %332 = vmatprep.subr.bf16.mxu0 0
    %333 = vmatpush2.bf16.msra.mxu0 0
    %334 = vmatprep.subr.bf16.mxu0 0
    %335 = vmatpush2.bf16.msra.mxu0 0
    %336 = vmatprep.subr.bf16.mxu0 0
    %337 = vmatpush2.bf16.msra.mxu0 0
    %338 = vmatprep.subr.bf16.mxu0 0
    %339 = vmatpush2.bf16.msra.mxu0 0
    %340 = vmatprep.mubr.bf16.mxu0 0
    %341 = vmatmul.mubr.bf16.gmra.mxu0 %v93
    %v342 = vpop.f32.mrf.mxu0
    %v343 = vadd.f32 %v131, %v342
    %v344 = vpop.f32.mrf.mxu0
    %v345 = vadd.f32 %v135, %v344
    %v346 = vpop.f32.mrf.mxu0
    %v347 = vpop.f32.mrf.mxu0
    %348 = vdwg.mxu0
    %349 = vmatprep.subr.bf16.mxu0 %v275
    %350 = vmatpush1.bf16.msra.mxu0 %v274
    %351 = vmatprep.subr.bf16.mxu0 %v271
    %352 = vmatpush1.bf16.msra.mxu0 %v270
    %353 = vmatprep.subr.bf16.mxu0 %v267
    %354 = vmatpush1.bf16.msra.mxu0 %v266
    %355 = vmatprep.subr.bf16.mxu0 %v263
    %356 = vmatpush1.bf16.msra.mxu0 %v262
    %357 = vmatprep.subr.bf16.mxu0 %v259
    %358 = vmatpush1.bf16.msra.mxu0 %v258
    %359 = vmatprep.subr.bf16.mxu0 %v255
    %360 = vmatpush1.bf16.msra.mxu0 %v254
    %361 = vmatprep.subr.bf16.mxu0 %v251
    %362 = vmatpush1.bf16.msra.mxu0 %v250
    %363 = vmatprep.subr.bf16.mxu0 %v247
    %364 = vmatpush1.bf16.msra.mxu0 %v246
    %365 = vmatprep.subr.bf16.mxu0 0
    %366 = vmatpush2.bf16.msra.mxu0 0
    %367 = vmatprep.subr.bf16.mxu0 0
    %368 = vmatpush2.bf16.msra.mxu0 0
    %369 = vmatprep.subr.bf16.mxu0 0
    %370 = vmatpush2.bf16.msra.mxu0 0
    %371 = vmatprep.subr.bf16.mxu0 0
    %372 = vmatpush2.bf16.msra.mxu0 0
    %373 = vmatprep.subr.bf16.mxu0 0
    %374 = vmatpush2.bf16.msra.mxu0 0
    %375 = vmatprep.subr.bf16.mxu0 0
    %376 = vmatpush2.bf16.msra.mxu0 0
    %377 = vmatprep.subr.bf16.mxu0 0
    %378 = vmatpush2.bf16.msra.mxu0 0
    %379 = vmatprep.subr.bf16.mxu0 0
    %380 = vmatpush2.bf16.msra.mxu0 0
    %381 = vmatprep.mubr.bf16.mxu0 0
    %382 = vmatmul.mubr.bf16.gmra.mxu0 %v93
    %v383 = vpop.f32.mrf.mxu0
    %v384 = vadd.f32 %v139, %v383
    %v385 = vpop.f32.mrf.mxu0
    %v386 = vadd.f32 %v143, %v385
    %v387 = vpop.f32.mrf.mxu0
    %v388 = vpop.f32.mrf.mxu0
    %389 = vdwg.mxu0
    %v390 = vtanh.pop %v343
    %v391 = vtanh.pop %v345
    %v392 = vtanh.pop %v384
    %v393 = vtanh.pop %v386
    %v394 = vpack.c.bf16 %v390, %v390
    %v395 = vpack.c.bf16 %v391, %v391
    %v396 = vpack.c.bf16 %v392, %v392
    %v397 = vpack.c.bf16 %v393, %v393
    %v398 = vld [vmem:[#allocation8] sm:$0xff]
    %v399 = vld [vmem:[#allocation8 + $0x8] sm:$0xff]
    %v400 = vld [vmem:[#allocation8 + $0x10] sm:$0xff]
    %v401 = vld [vmem:[#allocation8 + $0x18] sm:$0xff]
    %v402 = vld [vmem:[#allocation8 + $0x20] sm:$0xff]
    %v403 = vld [vmem:[#allocation8 + $0x28] sm:$0xff]
    %v404 = vld [vmem:[#allocation8 + $0x30] sm:$0xff]
    %v405 = vld [vmem:[#allocation8 + $0x38] sm:$0xff]
    %v406 = vld [vmem:[#allocation8 + $0x40] sm:$0xff]
    %v407 = vld [vmem:[#allocation8 + $0x48] sm:$0xff]
    %v408 = vld [vmem:[#allocation8 + $0x50] sm:$0xff]
    %v409 = vld [vmem:[#allocation8 + $0x58] sm:$0xff]
    %v410 = vld [vmem:[#allocation8 + $0x60] sm:$0xff]
    %v411 = vld [vmem:[#allocation8 + $0x68] sm:$0xff]
    %v412 = vld [vmem:[#allocation8 + $0x70] sm:$0xff]
    %v413 = vld [vmem:[#allocation8 + $0x78] sm:$0xff]
    %v414 = vld [vmem:[#allocation8 + $0x80] sm:$0xff]
    %v415 = vld [vmem:[#allocation8 + $0x88] sm:$0xff]
    %v416 = vld [vmem:[#allocation8 + $0x90] sm:$0xff]
    %v417 = vld [vmem:[#allocation8 + $0x98] sm:$0xff]
    %v418 = vld [vmem:[#allocation8 + $0xa0] sm:$0xff]
    %v419 = vld [vmem:[#allocation8 + $0xa8] sm:$0xff]
    %v420 = vld [vmem:[#allocation8 + $0xb0] sm:$0xff]
    %v421 = vld [vmem:[#allocation8 + $0xb8] sm:$0xff]
    %v422 = vld [vmem:[#allocation8 + $0xc0] sm:$0xff]
    %v423 = vld [vmem:[#allocation8 + $0xc8] sm:$0xff]
    %v424 = vld [vmem:[#allocation8 + $0xd0] sm:$0xff]
    %v425 = vld [vmem:[#allocation8 + $0xd8] sm:$0xff]
    %v426 = vld [vmem:[#allocation8 + $0xe0] sm:$0xff]
    %v427 = vld [vmem:[#allocation8 + $0xe8] sm:$0xff]
    %v428 = vld [vmem:[#allocation8 + $0xf0] sm:$0xff]
    %v429 = vld [vmem:[#allocation8 + $0xf8] sm:$0xff]
    %v430 = vld [vmem:[#allocation8 + $0x100] sm:$0xff]
    %v431 = vld [vmem:[#allocation8 + $0x108] sm:$0xff]
    %v432 = vld [vmem:[#allocation8 + $0x110] sm:$0xff]
    %v433 = vld [vmem:[#allocation8 + $0x118] sm:$0xff]
    %v434 = vld [vmem:[#allocation8 + $0x120] sm:$0xff]
    %v435 = vld [vmem:[#allocation8 + $0x128] sm:$0xff]
    %v436 = vld [vmem:[#allocation8 + $0x130] sm:$0xff]
    %v437 = vld [vmem:[#allocation8 + $0x138] sm:$0xff]
    %v438 = vld [vmem:[#allocation8 + $0x140] sm:$0xff]
    %v439 = vld [vmem:[#allocation8 + $0x148] sm:$0xff]
    %v440 = vld [vmem:[#allocation8 + $0x150] sm:$0xff]
    %v441 = vld [vmem:[#allocation8 + $0x158] sm:$0xff]
    %v442 = vld [vmem:[#allocation8 + $0x160] sm:$0xff]
    %v443 = vld [vmem:[#allocation8 + $0x168] sm:$0xff]
    %v444 = vld [vmem:[#allocation8 + $0x170] sm:$0xff]
    %v445 = vld [vmem:[#allocation8 + $0x178] sm:$0xff]
    %v446 = vld [vmem:[#allocation8 + $0x180] sm:$0xff]
    %v447 = vld [vmem:[#allocation8 + $0x188] sm:$0xff]
    %v448 = vld [vmem:[#allocation8 + $0x190] sm:$0xff]
    %v449 = vld [vmem:[#allocation8 + $0x198] sm:$0xff]
    %v450 = vld [vmem:[#allocation8 + $0x1a0] sm:$0xff]
    %v451 = vld [vmem:[#allocation8 + $0x1a8] sm:$0xff]
    %v452 = vld [vmem:[#allocation8 + $0x1b0] sm:$0xff]
    %v453 = vld [vmem:[#allocation8 + $0x1b8] sm:$0xff]
    %v454 = vld [vmem:[#allocation8 + $0x1c0] sm:$0xff]
    %v455 = vld [vmem:[#allocation8 + $0x1c8] sm:$0xff]
    %v456 = vld [vmem:[#allocation8 + $0x1d0] sm:$0xff]
    %v457 = vld [vmem:[#allocation8 + $0x1d8] sm:$0xff]
    %v458 = vld [vmem:[#allocation8 + $0x1e0] sm:$0xff]
    %v459 = vld [vmem:[#allocation8 + $0x1e8] sm:$0xff]
    %v460 = vld [vmem:[#allocation8 + $0x1f0] sm:$0xff]
    %v461 = vld [vmem:[#allocation8 + $0x1f8] sm:$0xff]
    %v462 = vld [vmem:[#allocation8 + $0x200] sm:$0xff]
    %v463 = vld [vmem:[#allocation8 + $0x208] sm:$0xff]
    %v464 = vld [vmem:[#allocation8 + $0x210] sm:$0xff]
    %v465 = vld [vmem:[#allocation8 + $0x218] sm:$0xff]
    %v466 = vld [vmem:[#allocation8 + $0x220] sm:$0xff]
    %v467 = vld [vmem:[#allocation8 + $0x228] sm:$0xff]
    %v468 = vld [vmem:[#allocation8 + $0x230] sm:$0xff]
    %v469 = vld [vmem:[#allocation8 + $0x238] sm:$0xff]
    %v470 = vld [vmem:[#allocation8 + $0x240] sm:$0xff]
    %v471 = vld [vmem:[#allocation8 + $0x248] sm:$0xff]
    %v472 = vld [vmem:[#allocation8 + $0x250] sm:$0xff]
    %v473 = vld [vmem:[#allocation8 + $0x258] sm:$0xff]
    %v474 = vld [vmem:[#allocation8 + $0x260] sm:$0xff]
    %v475 = vld [vmem:[#allocation8 + $0x268] sm:$0xff]
    %v476 = vld [vmem:[#allocation8 + $0x270] sm:$0xff]
    %v477 = vld [vmem:[#allocation8 + $0x278] sm:$0xff]
    %v478 = vld [vmem:[#allocation8 + $0x280] sm:$0xff]
    %v479 = vld [vmem:[#allocation8 + $0x288] sm:$0xff]
    %v480 = vld [vmem:[#allocation8 + $0x290] sm:$0xff]
    %v481 = vld [vmem:[#allocation8 + $0x298] sm:$0xff]
    %v482 = vld [vmem:[#allocation8 + $0x2a0] sm:$0xff]
    %v483 = vld [vmem:[#allocation8 + $0x2a8] sm:$0xff]
    %v484 = vld [vmem:[#allocation8 + $0x2b0] sm:$0xff]
    %v485 = vld [vmem:[#allocation8 + $0x2b8] sm:$0xff]
    %v486 = vld [vmem:[#allocation8 + $0x2c0] sm:$0xff]
    %v487 = vld [vmem:[#allocation8 + $0x2c8] sm:$0xff]
    %v488 = vld [vmem:[#allocation8 + $0x2d0] sm:$0xff]
    %v489 = vld [vmem:[#allocation8 + $0x2d8] sm:$0xff]
    %v490 = vld [vmem:[#allocation8 + $0x2e0] sm:$0xff]
    %v491 = vld [vmem:[#allocation8 + $0x2e8] sm:$0xff]
    %v492 = vld [vmem:[#allocation8 + $0x2f0] sm:$0xff]
    %v493 = vld [vmem:[#allocation8 + $0x2f8] sm:$0xff]
    %v494 = vld [vmem:[#allocation8 + $0x300] sm:$0xff]
    %v495 = vld [vmem:[#allocation8 + $0x308] sm:$0xff]
    %v496 = vld [vmem:[#allocation8 + $0x310] sm:$0xff]
    %v497 = vld [vmem:[#allocation8 + $0x318] sm:$0xff]
    %v498 = vld [vmem:[#allocation8 + $0x320] sm:$0xff]
    %v499 = vld [vmem:[#allocation8 + $0x328] sm:$0xff]
    %v500 = vld [vmem:[#allocation8 + $0x330] sm:$0xff]
    %v501 = vld [vmem:[#allocation8 + $0x338] sm:$0xff]
    %v502 = vld [vmem:[#allocation8 + $0x340] sm:$0xff]
    %v503 = vld [vmem:[#allocation8 + $0x348] sm:$0xff]
    %v504 = vld [vmem:[#allocation8 + $0x350] sm:$0xff]
    %v505 = vld [vmem:[#allocation8 + $0x358] sm:$0xff]
    %v506 = vld [vmem:[#allocation8 + $0x360] sm:$0xff]
    %v507 = vld [vmem:[#allocation8 + $0x368] sm:$0xff]
    %v508 = vld [vmem:[#allocation8 + $0x370] sm:$0xff]
    %v509 = vld [vmem:[#allocation8 + $0x378] sm:$0xff]
    %v510 = vld [vmem:[#allocation8 + $0x380] sm:$0xff]
    %v511 = vld [vmem:[#allocation8 + $0x388] sm:$0xff]
    %v512 = vld [vmem:[#allocation8 + $0x390] sm:$0xff]
    %v513 = vld [vmem:[#allocation8 + $0x398] sm:$0xff]
    %v514 = vld [vmem:[#allocation8 + $0x3a0] sm:$0xff]
    %v515 = vld [vmem:[#allocation8 + $0x3a8] sm:$0xff]
    %v516 = vld [vmem:[#allocation8 + $0x3b0] sm:$0xff]
    %v517 = vld [vmem:[#allocation8 + $0x3b8] sm:$0xff]
    %v518 = vld [vmem:[#allocation8 + $0x3c0] sm:$0xff]
    %v519 = vld [vmem:[#allocation8 + $0x3c8] sm:$0xff]
    %v520 = vld [vmem:[#allocation8 + $0x3d0] sm:$0xff]
    %v521 = vld [vmem:[#allocation8 + $0x3d8] sm:$0xff]
    %v522 = vld [vmem:[#allocation8 + $0x3e0] sm:$0xff]
    %v523 = vld [vmem:[#allocation8 + $0x3e8] sm:$0xff]
    %v524 = vld [vmem:[#allocation8 + $0x3f0] sm:$0xff]
    %v525 = vld [vmem:[#allocation8 + $0x3f8] sm:$0xff]
    %v526 = vld [vmem:[%s4] sm:$0xf]
    %v528 = vlaneseq
    %v529 = vshrl.u32 %v528, 7
    %v530 = vsub.s32 0, %v529
    %v531 = vrot.slane %v526, %v530
    %v532 = vlaneseq
    %v533 = vshrl.u32 %v532, 7
    %v534 = vsub.s32 1, %v533
    %v535 = vrot.slane %v526, %v534
    %v536 = vlaneseq
    %v537 = vshrl.u32 %v536, 7
    %v538 = vsub.s32 2, %v537
    %v539 = vrot.slane %v526, %v538
    %v540 = vlaneseq
    %v541 = vshrl.u32 %v540, 7
    %v542 = vsub.s32 3, %v541
    %v543 = vrot.slane %v526, %v542
    %v676 = vunpack.c.l.b16 %v398
    %v677 = vunpack.c.h.b16 %v398
    %v678 = vunpack.c.l.b16 %v399
    %v679 = vunpack.c.h.b16 %v399
    %v680 = vunpack.c.l.b16 %v400
    %v681 = vunpack.c.h.b16 %v400
    %v682 = vunpack.c.l.b16 %v401
    %v683 = vunpack.c.h.b16 %v401
    %v684 = vunpack.c.l.b16 %v402
    %v685 = vunpack.c.h.b16 %v402
    %v686 = vunpack.c.l.b16 %v403
    %v687 = vunpack.c.h.b16 %v403
    %v688 = vunpack.c.l.b16 %v404
    %v689 = vunpack.c.h.b16 %v404
    %v690 = vunpack.c.l.b16 %v405
    %v691 = vunpack.c.h.b16 %v405
    %v692 = vunpack.c.l.b16 %v406
    %v693 = vunpack.c.h.b16 %v406
    %v694 = vunpack.c.l.b16 %v407
    %v695 = vunpack.c.h.b16 %v407
    %v696 = vunpack.c.l.b16 %v408
    %v697 = vunpack.c.h.b16 %v408
    %v698 = vunpack.c.l.b16 %v409
    %v699 = vunpack.c.h.b16 %v409
    %v700 = vunpack.c.l.b16 %v410
    %v701 = vunpack.c.h.b16 %v410
    %v702 = vunpack.c.l.b16 %v411
    %v703 = vunpack.c.h.b16 %v411
    %v704 = vunpack.c.l.b16 %v412
    %v705 = vunpack.c.h.b16 %v412
    %v706 = vunpack.c.l.b16 %v413
    %v707 = vunpack.c.h.b16 %v413
    %v708 = vunpack.c.l.b16 %v414
    %v709 = vunpack.c.h.b16 %v414
    %v710 = vunpack.c.l.b16 %v415
    %v711 = vunpack.c.h.b16 %v415
    %v712 = vunpack.c.l.b16 %v416
    %v713 = vunpack.c.h.b16 %v416
    %v714 = vunpack.c.l.b16 %v417
    %v715 = vunpack.c.h.b16 %v417
    %v716 = vunpack.c.l.b16 %v418
    %v717 = vunpack.c.h.b16 %v418
    %v718 = vunpack.c.l.b16 %v419
    %v719 = vunpack.c.h.b16 %v419
    %v720 = vunpack.c.l.b16 %v420
    %v721 = vunpack.c.h.b16 %v420
    %v722 = vunpack.c.l.b16 %v421
    %v723 = vunpack.c.h.b16 %v421
    %v724 = vunpack.c.l.b16 %v422
    %v725 = vunpack.c.h.b16 %v422
    %v726 = vunpack.c.l.b16 %v423
    %v727 = vunpack.c.h.b16 %v423
    %v728 = vunpack.c.l.b16 %v424
    %v729 = vunpack.c.h.b16 %v424
    %v730 = vunpack.c.l.b16 %v425
    %v731 = vunpack.c.h.b16 %v425
    %v732 = vunpack.c.l.b16 %v426
    %v733 = vunpack.c.h.b16 %v426
    %v734 = vunpack.c.l.b16 %v427
    %v735 = vunpack.c.h.b16 %v427
    %v736 = vunpack.c.l.b16 %v428
    %v737 = vunpack.c.h.b16 %v428
    %v738 = vunpack.c.l.b16 %v429
    %v739 = vunpack.c.h.b16 %v429
    %v740 = vunpack.c.l.b16 %v430
    %v741 = vunpack.c.h.b16 %v430
    %v742 = vunpack.c.l.b16 %v431
    %v743 = vunpack.c.h.b16 %v431
    %v744 = vunpack.c.l.b16 %v432
    %v745 = vunpack.c.h.b16 %v432
    %v746 = vunpack.c.l.b16 %v433
    %v747 = vunpack.c.h.b16 %v433
    %v748 = vunpack.c.l.b16 %v434
    %v749 = vunpack.c.h.b16 %v434
    %v750 = vunpack.c.l.b16 %v435
    %v751 = vunpack.c.h.b16 %v435
    %v752 = vunpack.c.l.b16 %v436
    %v753 = vunpack.c.h.b16 %v436
    %v754 = vunpack.c.l.b16 %v437
    %v755 = vunpack.c.h.b16 %v437
    %v756 = vunpack.c.l.b16 %v438
    %v757 = vunpack.c.h.b16 %v438
    %v758 = vunpack.c.l.b16 %v439
    %v759 = vunpack.c.h.b16 %v439
    %v760 = vunpack.c.l.b16 %v440
    %v761 = vunpack.c.h.b16 %v440
    %v762 = vunpack.c.l.b16 %v441
    %v763 = vunpack.c.h.b16 %v441
    %v764 = vunpack.c.l.b16 %v442
    %v765 = vunpack.c.h.b16 %v442
    %v766 = vunpack.c.l.b16 %v443
    %v767 = vunpack.c.h.b16 %v443
    %v768 = vunpack.c.l.b16 %v444
    %v769 = vunpack.c.h.b16 %v444
    %v770 = vunpack.c.l.b16 %v445
    %v771 = vunpack.c.h.b16 %v445
    %v772 = vunpack.c.l.b16 %v446
    %v773 = vunpack.c.h.b16 %v446
    %v774 = vunpack.c.l.b16 %v447
    %v775 = vunpack.c.h.b16 %v447
    %v776 = vunpack.c.l.b16 %v448
    %v777 = vunpack.c.h.b16 %v448
    %v778 = vunpack.c.l.b16 %v449
    %v779 = vunpack.c.h.b16 %v449
    %v780 = vunpack.c.l.b16 %v450
    %v781 = vunpack.c.h.b16 %v450
    %v782 = vunpack.c.l.b16 %v451
    %v783 = vunpack.c.h.b16 %v451
    %v784 = vunpack.c.l.b16 %v452
    %v785 = vunpack.c.h.b16 %v452
    %v786 = vunpack.c.l.b16 %v453
    %v787 = vunpack.c.h.b16 %v453
    %v788 = vunpack.c.l.b16 %v454
    %v789 = vunpack.c.h.b16 %v454
    %v790 = vunpack.c.l.b16 %v455
    %v791 = vunpack.c.h.b16 %v455
    %v792 = vunpack.c.l.b16 %v456
    %v793 = vunpack.c.h.b16 %v456
    %v794 = vunpack.c.l.b16 %v457
    %v795 = vunpack.c.h.b16 %v457
    %v796 = vunpack.c.l.b16 %v458
    %v797 = vunpack.c.h.b16 %v458
    %v798 = vunpack.c.l.b16 %v459
    %v799 = vunpack.c.h.b16 %v459
    %v800 = vunpack.c.l.b16 %v460
    %v801 = vunpack.c.h.b16 %v460
    %v802 = vunpack.c.l.b16 %v461
    %v803 = vunpack.c.h.b16 %v461
    %v804 = vunpack.c.l.b16 %v462
    %v805 = vunpack.c.h.b16 %v462
    %v806 = vunpack.c.l.b16 %v463
    %v807 = vunpack.c.h.b16 %v463
    %v808 = vunpack.c.l.b16 %v464
    %v809 = vunpack.c.h.b16 %v464
    %v810 = vunpack.c.l.b16 %v465
    %v811 = vunpack.c.h.b16 %v465
    %v812 = vunpack.c.l.b16 %v466
    %v813 = vunpack.c.h.b16 %v466
    %v814 = vunpack.c.l.b16 %v467
    %v815 = vunpack.c.h.b16 %v467
    %v816 = vunpack.c.l.b16 %v468
    %v817 = vunpack.c.h.b16 %v468
    %v818 = vunpack.c.l.b16 %v469
    %v819 = vunpack.c.h.b16 %v469
    %v820 = vunpack.c.l.b16 %v470
    %v821 = vunpack.c.h.b16 %v470
    %v822 = vunpack.c.l.b16 %v471
    %v823 = vunpack.c.h.b16 %v471
    %v824 = vunpack.c.l.b16 %v472
    %v825 = vunpack.c.h.b16 %v472
    %v826 = vunpack.c.l.b16 %v473
    %v827 = vunpack.c.h.b16 %v473
    %v828 = vunpack.c.l.b16 %v474
    %v829 = vunpack.c.h.b16 %v474
    %v830 = vunpack.c.l.b16 %v475
    %v831 = vunpack.c.h.b16 %v475
    %v832 = vunpack.c.l.b16 %v476
    %v833 = vunpack.c.h.b16 %v476
    %v834 = vunpack.c.l.b16 %v477
    %v835 = vunpack.c.h.b16 %v477
    %v836 = vunpack.c.l.b16 %v478
    %v837 = vunpack.c.h.b16 %v478
    %v838 = vunpack.c.l.b16 %v479
    %v839 = vunpack.c.h.b16 %v479
    %v840 = vunpack.c.l.b16 %v480
    %v841 = vunpack.c.h.b16 %v480
    %v842 = vunpack.c.l.b16 %v481
    %v843 = vunpack.c.h.b16 %v481
    %v844 = vunpack.c.l.b16 %v482
    %v845 = vunpack.c.h.b16 %v482
    %v846 = vunpack.c.l.b16 %v483
    %v847 = vunpack.c.h.b16 %v483
    %v848 = vunpack.c.l.b16 %v484
    %v849 = vunpack.c.h.b16 %v484
    %v850 = vunpack.c.l.b16 %v485
    %v851 = vunpack.c.h.b16 %v485
    %v852 = vunpack.c.l.b16 %v486
    %v853 = vunpack.c.h.b16 %v486
    %v854 = vunpack.c.l.b16 %v487
    %v855 = vunpack.c.h.b16 %v487
    %v856 = vunpack.c.l.b16 %v488
    %v857 = vunpack.c.h.b16 %v488
    %v858 = vunpack.c.l.b16 %v489
    %v859 = vunpack.c.h.b16 %v489
    %v860 = vunpack.c.l.b16 %v490
    %v861 = vunpack.c.h.b16 %v490
    %v862 = vunpack.c.l.b16 %v491
    %v863 = vunpack.c.h.b16 %v491
    %v864 = vunpack.c.l.b16 %v492
    %v865 = vunpack.c.h.b16 %v492
    %v866 = vunpack.c.l.b16 %v493
    %v867 = vunpack.c.h.b16 %v493
    %v868 = vunpack.c.l.b16 %v494
    %v869 = vunpack.c.h.b16 %v494
    %v870 = vunpack.c.l.b16 %v495
    %v871 = vunpack.c.h.b16 %v495
    %v872 = vunpack.c.l.b16 %v496
    %v873 = vunpack.c.h.b16 %v496
    %v874 = vunpack.c.l.b16 %v497
    %v875 = vunpack.c.h.b16 %v497
    %v876 = vunpack.c.l.b16 %v498
    %v877 = vunpack.c.h.b16 %v498
    %v878 = vunpack.c.l.b16 %v499
    %v879 = vunpack.c.h.b16 %v499
    %v880 = vunpack.c.l.b16 %v500
    %v881 = vunpack.c.h.b16 %v500
    %v882 = vunpack.c.l.b16 %v501
    %v883 = vunpack.c.h.b16 %v501
    %v884 = vunpack.c.l.b16 %v502
    %v885 = vunpack.c.h.b16 %v502
    %v886 = vunpack.c.l.b16 %v503
    %v887 = vunpack.c.h.b16 %v503
    %v888 = vunpack.c.l.b16 %v504
    %v889 = vunpack.c.h.b16 %v504
    %v890 = vunpack.c.l.b16 %v505
    %v891 = vunpack.c.h.b16 %v505
    %v892 = vunpack.c.l.b16 %v506
    %v893 = vunpack.c.h.b16 %v506
    %v894 = vunpack.c.l.b16 %v507
    %v895 = vunpack.c.h.b16 %v507
    %v896 = vunpack.c.l.b16 %v508
    %v897 = vunpack.c.h.b16 %v508
    %v898 = vunpack.c.l.b16 %v509
    %v899 = vunpack.c.h.b16 %v509
    %v900 = vunpack.c.l.b16 %v510
    %v901 = vunpack.c.h.b16 %v510
    %v902 = vunpack.c.l.b16 %v511
    %v903 = vunpack.c.h.b16 %v511
    %v904 = vunpack.c.l.b16 %v512
    %v905 = vunpack.c.h.b16 %v512
    %v906 = vunpack.c.l.b16 %v513
    %v907 = vunpack.c.h.b16 %v513
    %v908 = vunpack.c.l.b16 %v514
    %v909 = vunpack.c.h.b16 %v514
    %v910 = vunpack.c.l.b16 %v515
    %v911 = vunpack.c.h.b16 %v515
    %v912 = vunpack.c.l.b16 %v516
    %v913 = vunpack.c.h.b16 %v516
    %v914 = vunpack.c.l.b16 %v517
    %v915 = vunpack.c.h.b16 %v517
    %v916 = vunpack.c.l.b16 %v518
    %v917 = vunpack.c.h.b16 %v518
    %v918 = vunpack.c.l.b16 %v519
    %v919 = vunpack.c.h.b16 %v519
    %v920 = vunpack.c.l.b16 %v520
    %v921 = vunpack.c.h.b16 %v520
    %v922 = vunpack.c.l.b16 %v521
    %v923 = vunpack.c.h.b16 %v521
    %v924 = vunpack.c.l.b16 %v522
    %v925 = vunpack.c.h.b16 %v522
    %v926 = vunpack.c.l.b16 %v523
    %v927 = vunpack.c.h.b16 %v523
    %v928 = vunpack.c.l.b16 %v524
    %v929 = vunpack.c.h.b16 %v524
    %v930 = vunpack.c.l.b16 %v525
    %v931 = vunpack.c.h.b16 %v525
    %v932 = vpack.c.b16 %v680, %v676
    %v933 = vpack.c.b16 %v681, %v677
    %v934 = vpack.c.b16 %v682, %v678
    %v935 = vpack.c.b16 %v683, %v679
    %v936 = vpack.c.b16 %v688, %v684
    %v937 = vpack.c.b16 %v689, %v685
    %v938 = vpack.c.b16 %v690, %v686
    %v939 = vpack.c.b16 %v691, %v687
    %v940 = vpack.c.b16 %v696, %v692
    %v941 = vpack.c.b16 %v697, %v693
    %v942 = vpack.c.b16 %v698, %v694
    %v943 = vpack.c.b16 %v699, %v695
    %v944 = vpack.c.b16 %v704, %v700
    %v945 = vpack.c.b16 %v705, %v701
    %v946 = vpack.c.b16 %v706, %v702
    %v947 = vpack.c.b16 %v707, %v703
    %v948 = vpack.c.b16 %v712, %v708
    %v949 = vpack.c.b16 %v713, %v709
    %v950 = vpack.c.b16 %v714, %v710
    %v951 = vpack.c.b16 %v715, %v711
    %v952 = vpack.c.b16 %v720, %v716
    %v953 = vpack.c.b16 %v721, %v717
    %v954 = vpack.c.b16 %v722, %v718
    %v955 = vpack.c.b16 %v723, %v719
    %v956 = vpack.c.b16 %v728, %v724
    %v957 = vpack.c.b16 %v729, %v725
    %v958 = vpack.c.b16 %v730, %v726
    %v959 = vpack.c.b16 %v731, %v727
    %v960 = vpack.c.b16 %v736, %v732
    %v961 = vpack.c.b16 %v737, %v733
    %v962 = vpack.c.b16 %v738, %v734
    %v963 = vpack.c.b16 %v739, %v735
    %v964 = vpack.c.b16 %v744, %v740
    %v965 = vpack.c.b16 %v745, %v741
    %v966 = vpack.c.b16 %v746, %v742
    %v967 = vpack.c.b16 %v747, %v743
    %v968 = vpack.c.b16 %v752, %v748
    %v969 = vpack.c.b16 %v753, %v749
    %v970 = vpack.c.b16 %v754, %v750
    %v971 = vpack.c.b16 %v755, %v751
    %v972 = vpack.c.b16 %v760, %v756
    %v973 = vpack.c.b16 %v761, %v757
    %v974 = vpack.c.b16 %v762, %v758
    %v975 = vpack.c.b16 %v763, %v759
    %v976 = vpack.c.b16 %v768, %v764
    %v977 = vpack.c.b16 %v769, %v765
    %v978 = vpack.c.b16 %v770, %v766
    %v979 = vpack.c.b16 %v771, %v767
    %v980 = vpack.c.b16 %v776, %v772
    %v981 = vpack.c.b16 %v777, %v773
    %v982 = vpack.c.b16 %v778, %v774
    %v983 = vpack.c.b16 %v779, %v775
    %v984 = vpack.c.b16 %v784, %v780
    %v985 = vpack.c.b16 %v785, %v781
    %v986 = vpack.c.b16 %v786, %v782
    %v987 = vpack.c.b16 %v787, %v783
    %v988 = vpack.c.b16 %v792, %v788
    %v989 = vpack.c.b16 %v793, %v789
    %v990 = vpack.c.b16 %v794, %v790
    %v991 = vpack.c.b16 %v795, %v791
    %v992 = vpack.c.b16 %v800, %v796
    %v993 = vpack.c.b16 %v801, %v797
    %v994 = vpack.c.b16 %v802, %v798
    %v995 = vpack.c.b16 %v803, %v799
    %v996 = vpack.c.b16 %v808, %v804
    %v997 = vpack.c.b16 %v809, %v805
    %v998 = vpack.c.b16 %v810, %v806
    %v999 = vpack.c.b16 %v811, %v807
    %v1000 = vpack.c.b16 %v816, %v812
    %v1001 = vpack.c.b16 %v817, %v813
    %v1002 = vpack.c.b16 %v818, %v814
    %v1003 = vpack.c.b16 %v819, %v815
    %v1004 = vpack.c.b16 %v824, %v820
    %v1005 = vpack.c.b16 %v825, %v821
    %v1006 = vpack.c.b16 %v826, %v822
    %v1007 = vpack.c.b16 %v827, %v823
    %v1008 = vpack.c.b16 %v832, %v828
    %v1009 = vpack.c.b16 %v833, %v829
    %v1010 = vpack.c.b16 %v834, %v830
    %v1011 = vpack.c.b16 %v835, %v831
    %v1012 = vpack.c.b16 %v840, %v836
    %v1013 = vpack.c.b16 %v841, %v837
    %v1014 = vpack.c.b16 %v842, %v838
    %v1015 = vpack.c.b16 %v843, %v839
    %v1016 = vpack.c.b16 %v848, %v844
    %v1017 = vpack.c.b16 %v849, %v845
    %v1018 = vpack.c.b16 %v850, %v846
    %v1019 = vpack.c.b16 %v851, %v847
    %v1020 = vpack.c.b16 %v856, %v852
    %v1021 = vpack.c.b16 %v857, %v853
    %v1022 = vpack.c.b16 %v858, %v854
    %v1023 = vpack.c.b16 %v859, %v855
    %v1024 = vpack.c.b16 %v864, %v860
    %v1025 = vpack.c.b16 %v865, %v861
    %v1026 = vpack.c.b16 %v866, %v862
    %v1027 = vpack.c.b16 %v867, %v863
    %v1028 = vpack.c.b16 %v872, %v868
    %v1029 = vpack.c.b16 %v873, %v869
    %v1030 = vpack.c.b16 %v874, %v870
    %v1031 = vpack.c.b16 %v875, %v871
    %v1032 = vpack.c.b16 %v880, %v876
    %v1033 = vpack.c.b16 %v881, %v877
    %v1034 = vpack.c.b16 %v882, %v878
    %v1035 = vpack.c.b16 %v883, %v879
    %v1036 = vpack.c.b16 %v888, %v884
    %v1037 = vpack.c.b16 %v889, %v885
    %v1038 = vpack.c.b16 %v890, %v886
    %v1039 = vpack.c.b16 %v891, %v887
    %v1040 = vpack.c.b16 %v896, %v892
    %v1041 = vpack.c.b16 %v897, %v893
    %v1042 = vpack.c.b16 %v898, %v894
    %v1043 = vpack.c.b16 %v899, %v895
    %v1044 = vpack.c.b16 %v904, %v900
    %v1045 = vpack.c.b16 %v905, %v901
    %v1046 = vpack.c.b16 %v906, %v902
    %v1047 = vpack.c.b16 %v907, %v903
    %v1048 = vpack.c.b16 %v912, %v908
    %v1049 = vpack.c.b16 %v913, %v909
    %v1050 = vpack.c.b16 %v914, %v910
    %v1051 = vpack.c.b16 %v915, %v911
    %v1052 = vpack.c.b16 %v920, %v916
    %v1053 = vpack.c.b16 %v921, %v917
    %v1054 = vpack.c.b16 %v922, %v918
    %v1055 = vpack.c.b16 %v923, %v919
    %v1056 = vpack.c.b16 %v928, %v924
    %v1057 = vpack.c.b16 %v929, %v925
    %v1058 = vpack.c.b16 %v930, %v926
    %v1059 = vpack.c.b16 %v931, %v927
    %1188 = vmatprep.subr.bf16.mxu0 %v961
    %1189 = vmatpush1.bf16.msra.mxu0 %v960
    %1190 = vmatprep.subr.bf16.mxu0 %v957
    %1191 = vmatpush1.bf16.msra.mxu0 %v956
    %1192 = vmatprep.subr.bf16.mxu0 %v953
    %1193 = vmatpush1.bf16.msra.mxu0 %v952
    %1194 = vmatprep.subr.bf16.mxu0 %v949
    %1195 = vmatpush1.bf16.msra.mxu0 %v948
    %1196 = vmatprep.subr.bf16.mxu0 %v945
    %1197 = vmatpush1.bf16.msra.mxu0 %v944
    %1198 = vmatprep.subr.bf16.mxu0 %v941
    %1199 = vmatpush1.bf16.msra.mxu0 %v940
    %1200 = vmatprep.subr.bf16.mxu0 %v937
    %1201 = vmatpush1.bf16.msra.mxu0 %v936
    %1202 = vmatprep.subr.bf16.mxu0 %v933
    %1203 = vmatpush1.bf16.msra.mxu0 %v932
    %1204 = vmatprep.subr.bf16.mxu0 %v993
    %1205 = vmatpush2.bf16.msra.mxu0 %v992
    %1206 = vmatprep.subr.bf16.mxu0 %v989
    %1207 = vmatpush2.bf16.msra.mxu0 %v988
    %1208 = vmatprep.subr.bf16.mxu0 %v985
    %1209 = vmatpush2.bf16.msra.mxu0 %v984
    %1210 = vmatprep.subr.bf16.mxu0 %v981
    %1211 = vmatpush2.bf16.msra.mxu0 %v980
    %1212 = vmatprep.subr.bf16.mxu0 %v977
    %1213 = vmatpush2.bf16.msra.mxu0 %v976
    %1214 = vmatprep.subr.bf16.mxu0 %v973
    %1215 = vmatpush2.bf16.msra.mxu0 %v972
    %1216 = vmatprep.subr.bf16.mxu0 %v969
    %1217 = vmatpush2.bf16.msra.mxu0 %v968
    %1218 = vmatprep.subr.bf16.mxu0 %v965
    %1219 = vmatpush2.bf16.msra.mxu0 %v964
    %1220 = vmatprep.mubr.bf16.mxu0 %v395
    %1221 = vmatmul.mubr.bf16.gmra.mxu0 %v394
    %v1222 = vpop.f32.mrf.mxu0
    %v1223 = vadd.f32 %v531, %v1222
    %v1224 = vpop.f32.mrf.mxu0
    %v1225 = vadd.f32 %v535, %v1224
    %v1226 = vpop.f32.mrf.mxu0
    %v1227 = vpop.f32.mrf.mxu0
    %1228 = vdwg.mxu0
    %1229 = vmatprep.subr.bf16.mxu0 %v1025
    %1230 = vmatpush1.bf16.msra.mxu0 %v1024
    %1231 = vmatprep.subr.bf16.mxu0 %v1021
    %1232 = vmatpush1.bf16.msra.mxu0 %v1020
    %1233 = vmatprep.subr.bf16.mxu0 %v1017
    %1234 = vmatpush1.bf16.msra.mxu0 %v1016
    %1235 = vmatprep.subr.bf16.mxu0 %v1013
    %1236 = vmatpush1.bf16.msra.mxu0 %v1012
    %1237 = vmatprep.subr.bf16.mxu0 %v1009
    %1238 = vmatpush1.bf16.msra.mxu0 %v1008
    %1239 = vmatprep.subr.bf16.mxu0 %v1005
    %1240 = vmatpush1.bf16.msra.mxu0 %v1004
    %1241 = vmatprep.subr.bf16.mxu0 %v1001
    %1242 = vmatpush1.bf16.msra.mxu0 %v1000
    %1243 = vmatprep.subr.bf16.mxu0 %v997
    %1244 = vmatpush1.bf16.msra.mxu0 %v996
    %1245 = vmatprep.subr.bf16.mxu0 %v1057
    %1246 = vmatpush2.bf16.msra.mxu0 %v1056
    %1247 = vmatprep.subr.bf16.mxu0 %v1053
    %1248 = vmatpush2.bf16.msra.mxu0 %v1052
    %1249 = vmatprep.subr.bf16.mxu0 %v1049
    %1250 = vmatpush2.bf16.msra.mxu0 %v1048
    %1251 = vmatprep.subr.bf16.mxu0 %v1045
    %1252 = vmatpush2.bf16.msra.mxu0 %v1044
    %1253 = vmatprep.subr.bf16.mxu0 %v1041
    %1254 = vmatpush2.bf16.msra.mxu0 %v1040
    %1255 = vmatprep.subr.bf16.mxu0 %v1037
    %1256 = vmatpush2.bf16.msra.mxu0 %v1036
    %1257 = vmatprep.subr.bf16.mxu0 %v1033
    %1258 = vmatpush2.bf16.msra.mxu0 %v1032
    %1259 = vmatprep.subr.bf16.mxu0 %v1029
    %1260 = vmatpush2.bf16.msra.mxu0 %v1028
    %1261 = vmatprep.mubr.bf16.mxu0 %v397
    %1262 = vmatmul.mubr.bf16.gmra.mxu0 %v396
    %v1263 = vpop.f32.mrf.mxu0
    %v1264 = vadd.f32 %v1223, %v1263
    %v1265 = vpop.f32.mrf.mxu0
    %v1266 = vadd.f32 %v1225, %v1265
    %v1267 = vpop.f32.mrf.mxu0
    %v1268 = vpop.f32.mrf.mxu0
    %1269 = vdwg.mxu0
    %1270 = vmatprep.subr.bf16.mxu0 %v963
    %1271 = vmatpush1.bf16.msra.mxu0 %v962
    %1272 = vmatprep.subr.bf16.mxu0 %v959
    %1273 = vmatpush1.bf16.msra.mxu0 %v958
    %1274 = vmatprep.subr.bf16.mxu0 %v955
    %1275 = vmatpush1.bf16.msra.mxu0 %v954
    %1276 = vmatprep.subr.bf16.mxu0 %v951
    %1277 = vmatpush1.bf16.msra.mxu0 %v950
    %1278 = vmatprep.subr.bf16.mxu0 %v947
    %1279 = vmatpush1.bf16.msra.mxu0 %v946
    %1280 = vmatprep.subr.bf16.mxu0 %v943
    %1281 = vmatpush1.bf16.msra.mxu0 %v942
    %1282 = vmatprep.subr.bf16.mxu0 %v939
    %1283 = vmatpush1.bf16.msra.mxu0 %v938
    %1284 = vmatprep.subr.bf16.mxu0 %v935
    %1285 = vmatpush1.bf16.msra.mxu0 %v934
    %1286 = vmatprep.subr.bf16.mxu0 %v995
    %1287 = vmatpush2.bf16.msra.mxu0 %v994
    %1288 = vmatprep.subr.bf16.mxu0 %v991
    %1289 = vmatpush2.bf16.msra.mxu0 %v990
    %1290 = vmatprep.subr.bf16.mxu0 %v987
    %1291 = vmatpush2.bf16.msra.mxu0 %v986
    %1292 = vmatprep.subr.bf16.mxu0 %v983
    %1293 = vmatpush2.bf16.msra.mxu0 %v982
    %1294 = vmatprep.subr.bf16.mxu0 %v979
    %1295 = vmatpush2.bf16.msra.mxu0 %v978
    %1296 = vmatprep.subr.bf16.mxu0 %v975
    %1297 = vmatpush2.bf16.msra.mxu0 %v974
    %1298 = vmatprep.subr.bf16.mxu0 %v971
    %1299 = vmatpush2.bf16.msra.mxu0 %v970
    %1300 = vmatprep.subr.bf16.mxu0 %v967
    %1301 = vmatpush2.bf16.msra.mxu0 %v966
    %1302 = vmatprep.mubr.bf16.mxu0 %v395
    %1303 = vmatmul.mubr.bf16.gmra.mxu0 %v394
    %v1304 = vpop.f32.mrf.mxu0
    %v1305 = vadd.f32 %v539, %v1304
    %v1306 = vpop.f32.mrf.mxu0
    %v1307 = vadd.f32 %v543, %v1306
    %v1308 = vpop.f32.mrf.mxu0
    %v1309 = vpop.f32.mrf.mxu0
    %1310 = vdwg.mxu0
    %1311 = vmatprep.subr.bf16.mxu0 %v1027
    %1312 = vmatpush1.bf16.msra.mxu0 %v1026
    %1313 = vmatprep.subr.bf16.mxu0 %v1023
    %1314 = vmatpush1.bf16.msra.mxu0 %v1022
    %1315 = vmatprep.subr.bf16.mxu0 %v1019
    %1316 = vmatpush1.bf16.msra.mxu0 %v1018
    %1317 = vmatprep.subr.bf16.mxu0 %v1015
    %1318 = vmatpush1.bf16.msra.mxu0 %v1014
    %1319 = vmatprep.subr.bf16.mxu0 %v1011
    %1320 = vmatpush1.bf16.msra.mxu0 %v1010
    %1321 = vmatprep.subr.bf16.mxu0 %v1007
    %1322 = vmatpush1.bf16.msra.mxu0 %v1006
    %1323 = vmatprep.subr.bf16.mxu0 %v1003
    %1324 = vmatpush1.bf16.msra.mxu0 %v1002
    %1325 = vmatprep.subr.bf16.mxu0 %v999
    %1326 = vmatpush1.bf16.msra.mxu0 %v998
    %1327 = vmatprep.subr.bf16.mxu0 %v1059
    %1328 = vmatpush2.bf16.msra.mxu0 %v1058
    %1329 = vmatprep.subr.bf16.mxu0 %v1055
    %1330 = vmatpush2.bf16.msra.mxu0 %v1054
    %1331 = vmatprep.subr.bf16.mxu0 %v1051
    %1332 = vmatpush2.bf16.msra.mxu0 %v1050
    %1333 = vmatprep.subr.bf16.mxu0 %v1047
    %1334 = vmatpush2.bf16.msra.mxu0 %v1046
    %1335 = vmatprep.subr.bf16.mxu0 %v1043
    %1336 = vmatpush2.bf16.msra.mxu0 %v1042
    %1337 = vmatprep.subr.bf16.mxu0 %v1039
    %1338 = vmatpush2.bf16.msra.mxu0 %v1038
    %1339 = vmatprep.subr.bf16.mxu0 %v1035
    %1340 = vmatpush2.bf16.msra.mxu0 %v1034
    %1341 = vmatprep.subr.bf16.mxu0 %v1031
    %1342 = vmatpush2.bf16.msra.mxu0 %v1030
    %1343 = vmatprep.mubr.bf16.mxu0 %v397
    %1344 = vmatmul.mubr.bf16.gmra.mxu0 %v396
    %v1345 = vpop.f32.mrf.mxu0
    %v1346 = vadd.f32 %v1305, %v1345
    %v1347 = vpop.f32.mrf.mxu0
    %v1348 = vadd.f32 %v1307, %v1347
    %v1349 = vpop.f32.mrf.mxu0
    %v1350 = vpop.f32.mrf.mxu0
    %1351 = vdwg.mxu0
    %v1352 = vtanh.pop %v1264
    %v1353 = vtanh.pop %v1266
    %v1354 = vtanh.pop %v1346
    %v1355 = vtanh.pop %v1348
    %v1356 = vpack.c.bf16 %v1352, %v1352
    %v1357 = vpack.c.bf16 %v1353, %v1353
    %v1358 = vpack.c.bf16 %v1354, %v1354
    %v1359 = vpack.c.bf16 %v1355, %v1355
    %v1360 = vld [vmem:[#allocation10] sm:$0xf]
    %v1361 = vld [vmem:[#allocation10 + $0x4] sm:$0xf]
    %v1362 = vld [vmem:[#allocation10 + $0x8] sm:$0xf]
    %v1363 = vld [vmem:[#allocation10 + $0xc] sm:$0xf]
    %v1364 = vld [vmem:[#allocation10 + $0x10] sm:$0xf]
    %v1365 = vld [vmem:[#allocation10 + $0x14] sm:$0xf]
    %v1366 = vld [vmem:[#allocation10 + $0x18] sm:$0xf]
    %v1367 = vld [vmem:[#allocation10 + $0x1c] sm:$0xf]
    %v1368 = vld [vmem:[#allocation10 + $0x20] sm:$0xf]
    %v1369 = vld [vmem:[#allocation10 + $0x24] sm:$0xf]
    %v1370 = vld [vmem:[#allocation10 + $0x28] sm:$0xf]
    %v1371 = vld [vmem:[#allocation10 + $0x2c] sm:$0xf]
    %v1372 = vld [vmem:[#allocation10 + $0x30] sm:$0xf]
    %v1373 = vld [vmem:[#allocation10 + $0x34] sm:$0xf]
    %v1374 = vld [vmem:[#allocation10 + $0x38] sm:$0xf]
    %v1375 = vld [vmem:[#allocation10 + $0x3c] sm:$0xf]
    %v1376 = vld [vmem:[#allocation10 + $0x40] sm:$0xf]
    %v1377 = vld [vmem:[#allocation10 + $0x44] sm:$0xf]
    %v1378 = vld [vmem:[#allocation10 + $0x48] sm:$0xf]
    %v1379 = vld [vmem:[#allocation10 + $0x4c] sm:$0xf]
    %v1380 = vld [vmem:[#allocation10 + $0x50] sm:$0xf]
    %v1381 = vld [vmem:[#allocation10 + $0x54] sm:$0xf]
    %v1382 = vld [vmem:[#allocation10 + $0x58] sm:$0xf]
    %v1383 = vld [vmem:[#allocation10 + $0x5c] sm:$0xf]
    %v1384 = vld [vmem:[#allocation10 + $0x60] sm:$0xf]
    %v1385 = vld [vmem:[#allocation10 + $0x64] sm:$0xf]
    %v1386 = vld [vmem:[#allocation10 + $0x68] sm:$0xf]
    %v1387 = vld [vmem:[#allocation10 + $0x6c] sm:$0xf]
    %v1388 = vld [vmem:[#allocation10 + $0x70] sm:$0xf]
    %v1389 = vld [vmem:[#allocation10 + $0x74] sm:$0xf]
    %v1390 = vld [vmem:[#allocation10 + $0x78] sm:$0xf]
    %v1391 = vld [vmem:[#allocation10 + $0x7c] sm:$0xf]
    %v1392 = vld [vmem:[#allocation10 + $0x80] sm:$0xf]
    %v1393 = vld [vmem:[#allocation10 + $0x84] sm:$0xf]
    %v1394 = vld [vmem:[#allocation10 + $0x88] sm:$0xf]
    %v1395 = vld [vmem:[#allocation10 + $0x8c] sm:$0xf]
    %v1396 = vld [vmem:[#allocation10 + $0x90] sm:$0xf]
    %v1397 = vld [vmem:[#allocation10 + $0x94] sm:$0xf]
    %v1398 = vld [vmem:[#allocation10 + $0x98] sm:$0xf]
    %v1399 = vld [vmem:[#allocation10 + $0x9c] sm:$0xf]
    %v1400 = vld [vmem:[#allocation10 + $0xa0] sm:$0xf]
    %v1401 = vld [vmem:[#allocation10 + $0xa4] sm:$0xf]
    %v1402 = vld [vmem:[#allocation10 + $0xa8] sm:$0xf]
    %v1403 = vld [vmem:[#allocation10 + $0xac] sm:$0xf]
    %v1404 = vld [vmem:[#allocation10 + $0xb0] sm:$0xf]
    %v1405 = vld [vmem:[#allocation10 + $0xb4] sm:$0xf]
    %v1406 = vld [vmem:[#allocation10 + $0xb8] sm:$0xf]
    %v1407 = vld [vmem:[#allocation10 + $0xbc] sm:$0xf]
    %v1408 = vld [vmem:[#allocation10 + $0xc0] sm:$0xf]
    %v1409 = vld [vmem:[#allocation10 + $0xc4] sm:$0xf]
    %v1410 = vld [vmem:[#allocation10 + $0xc8] sm:$0xf]
    %v1411 = vld [vmem:[#allocation10 + $0xcc] sm:$0xf]
    %v1412 = vld [vmem:[#allocation10 + $0xd0] sm:$0xf]
    %v1413 = vld [vmem:[#allocation10 + $0xd4] sm:$0xf]
    %v1414 = vld [vmem:[#allocation10 + $0xd8] sm:$0xf]
    %v1415 = vld [vmem:[#allocation10 + $0xdc] sm:$0xf]
    %v1416 = vld [vmem:[#allocation10 + $0xe0] sm:$0xf]
    %v1417 = vld [vmem:[#allocation10 + $0xe4] sm:$0xf]
    %v1418 = vld [vmem:[#allocation10 + $0xe8] sm:$0xf]
    %v1419 = vld [vmem:[#allocation10 + $0xec] sm:$0xf]
    %v1420 = vld [vmem:[#allocation10 + $0xf0] sm:$0xf]
    %v1421 = vld [vmem:[#allocation10 + $0xf4] sm:$0xf]
    %v1422 = vld [vmem:[#allocation10 + $0xf8] sm:$0xf]
    %v1423 = vld [vmem:[#allocation10 + $0xfc] sm:$0xf]
    %v1424 = vld [vmem:[%s6] sm:$0x1]
    %v1426 = vlaneseq
    %v1427 = vshrl.u32 %v1426, 7
    %v1428 = vsub.s32 0, %v1427
    %v1429 = vrot.slane %v1424, %v1428
    %v1495 = vunpack.c.l.b16 %v1360
    %v1496 = vunpack.c.l.b16 %v1361
    %v1497 = vunpack.c.l.b16 %v1362
    %v1498 = vunpack.c.l.b16 %v1363
    %v1499 = vunpack.c.l.b16 %v1364
    %v1500 = vunpack.c.l.b16 %v1365
    %v1501 = vunpack.c.l.b16 %v1366
    %v1502 = vunpack.c.l.b16 %v1367
    %v1503 = vunpack.c.l.b16 %v1368
    %v1504 = vunpack.c.l.b16 %v1369
    %v1505 = vunpack.c.l.b16 %v1370
    %v1506 = vunpack.c.l.b16 %v1371
    %v1507 = vunpack.c.l.b16 %v1372
    %v1508 = vunpack.c.l.b16 %v1373
    %v1509 = vunpack.c.l.b16 %v1374
    %v1510 = vunpack.c.l.b16 %v1375
    %v1511 = vunpack.c.l.b16 %v1376
    %v1512 = vunpack.c.l.b16 %v1377
    %v1513 = vunpack.c.l.b16 %v1378
    %v1514 = vunpack.c.l.b16 %v1379
    %v1515 = vunpack.c.l.b16 %v1380
    %v1516 = vunpack.c.l.b16 %v1381
    %v1517 = vunpack.c.l.b16 %v1382
    %v1518 = vunpack.c.l.b16 %v1383
    %v1519 = vunpack.c.l.b16 %v1384
    %v1520 = vunpack.c.l.b16 %v1385
    %v1521 = vunpack.c.l.b16 %v1386
    %v1522 = vunpack.c.l.b16 %v1387
    %v1523 = vunpack.c.l.b16 %v1388
    %v1524 = vunpack.c.l.b16 %v1389
    %v1525 = vunpack.c.l.b16 %v1390
    %v1526 = vunpack.c.l.b16 %v1391
    %v1527 = vunpack.c.l.b16 %v1392
    %v1528 = vunpack.c.l.b16 %v1393
    %v1529 = vunpack.c.l.b16 %v1394
    %v1530 = vunpack.c.l.b16 %v1395
    %v1531 = vunpack.c.l.b16 %v1396
    %v1532 = vunpack.c.l.b16 %v1397
    %v1533 = vunpack.c.l.b16 %v1398
    %v1534 = vunpack.c.l.b16 %v1399
    %v1535 = vunpack.c.l.b16 %v1400
    %v1536 = vunpack.c.l.b16 %v1401
    %v1537 = vunpack.c.l.b16 %v1402
    %v1538 = vunpack.c.l.b16 %v1403
    %v1539 = vunpack.c.l.b16 %v1404
    %v1540 = vunpack.c.l.b16 %v1405
    %v1541 = vunpack.c.l.b16 %v1406
    %v1542 = vunpack.c.l.b16 %v1407
    %v1543 = vunpack.c.l.b16 %v1408
    %v1544 = vunpack.c.l.b16 %v1409
    %v1545 = vunpack.c.l.b16 %v1410
    %v1546 = vunpack.c.l.b16 %v1411
    %v1547 = vunpack.c.l.b16 %v1412
    %v1548 = vunpack.c.l.b16 %v1413
    %v1549 = vunpack.c.l.b16 %v1414
    %v1550 = vunpack.c.l.b16 %v1415
    %v1551 = vunpack.c.l.b16 %v1416
    %v1552 = vunpack.c.l.b16 %v1417
    %v1553 = vunpack.c.l.b16 %v1418
    %v1554 = vunpack.c.l.b16 %v1419
    %v1555 = vunpack.c.l.b16 %v1420
    %v1556 = vunpack.c.l.b16 %v1421
    %v1557 = vunpack.c.l.b16 %v1422
    %v1558 = vunpack.c.l.b16 %v1423
    %v1559 = vpack.c.b16 %v1496, %v1495
    %v1560 = vpack.c.b16 %v1498, %v1497
    %v1561 = vpack.c.b16 %v1500, %v1499
    %v1562 = vpack.c.b16 %v1502, %v1501
    %v1563 = vpack.c.b16 %v1504, %v1503
    %v1564 = vpack.c.b16 %v1506, %v1505
    %v1565 = vpack.c.b16 %v1508, %v1507
    %v1566 = vpack.c.b16 %v1510, %v1509
    %v1567 = vpack.c.b16 %v1512, %v1511
    %v1568 = vpack.c.b16 %v1514, %v1513
    %v1569 = vpack.c.b16 %v1516, %v1515
    %v1570 = vpack.c.b16 %v1518, %v1517
    %v1571 = vpack.c.b16 %v1520, %v1519
    %v1572 = vpack.c.b16 %v1522, %v1521
    %v1573 = vpack.c.b16 %v1524, %v1523
    %v1574 = vpack.c.b16 %v1526, %v1525
    %v1575 = vpack.c.b16 %v1528, %v1527
    %v1576 = vpack.c.b16 %v1530, %v1529
    %v1577 = vpack.c.b16 %v1532, %v1531
    %v1578 = vpack.c.b16 %v1534, %v1533
    %v1579 = vpack.c.b16 %v1536, %v1535
    %v1580 = vpack.c.b16 %v1538, %v1537
    %v1581 = vpack.c.b16 %v1540, %v1539
    %v1582 = vpack.c.b16 %v1542, %v1541
    %v1583 = vpack.c.b16 %v1544, %v1543
    %v1584 = vpack.c.b16 %v1546, %v1545
    %v1585 = vpack.c.b16 %v1548, %v1547
    %v1586 = vpack.c.b16 %v1550, %v1549
    %v1587 = vpack.c.b16 %v1552, %v1551
    %v1588 = vpack.c.b16 %v1554, %v1553
    %v1589 = vpack.c.b16 %v1556, %v1555
    %v1590 = vpack.c.b16 %v1558, %v1557
    %1623 = vmatprep.subr.bf16.mxu0 0
    %1624 = vmatpush1.bf16.msra.mxu0 %v1566
    %1625 = vmatprep.subr.bf16.mxu0 0
    %1626 = vmatpush1.bf16.msra.mxu0 %v1565
    %1627 = vmatprep.subr.bf16.mxu0 0
    %1628 = vmatpush1.bf16.msra.mxu0 %v1564
    %1629 = vmatprep.subr.bf16.mxu0 0
    %1630 = vmatpush1.bf16.msra.mxu0 %v1563
    %1631 = vmatprep.subr.bf16.mxu0 0
    %1632 = vmatpush1.bf16.msra.mxu0 %v1562
    %1633 = vmatprep.subr.bf16.mxu0 0
    %1634 = vmatpush1.bf16.msra.mxu0 %v1561
    %1635 = vmatprep.subr.bf16.mxu0 0
    %1636 = vmatpush1.bf16.msra.mxu0 %v1560
    %1637 = vmatprep.subr.bf16.mxu0 0
    %1638 = vmatpush1.bf16.msra.mxu0 %v1559
    %1639 = vmatprep.subr.bf16.mxu0 0
    %1640 = vmatpush2.bf16.msra.mxu0 %v1574
    %1641 = vmatprep.subr.bf16.mxu0 0
    %1642 = vmatpush2.bf16.msra.mxu0 %v1573
    %1643 = vmatprep.subr.bf16.mxu0 0
    %1644 = vmatpush2.bf16.msra.mxu0 %v1572
    %1645 = vmatprep.subr.bf16.mxu0 0
    %1646 = vmatpush2.bf16.msra.mxu0 %v1571
    %1647 = vmatprep.subr.bf16.mxu0 0
    %1648 = vmatpush2.bf16.msra.mxu0 %v1570
    %1649 = vmatprep.subr.bf16.mxu0 0
    %1650 = vmatpush2.bf16.msra.mxu0 %v1569
    %1651 = vmatprep.subr.bf16.mxu0 0
    %1652 = vmatpush2.bf16.msra.mxu0 %v1568
    %1653 = vmatprep.subr.bf16.mxu0 0
    %1654 = vmatpush2.bf16.msra.mxu0 %v1567
    %1655 = vmatprep.mubr.bf16.mxu0 %v1357
    %1656 = vmatmul.mubr.bf16.gmra.mxu0 %v1356
    %v1657 = vpop.f32.mrf.mxu0
    %v1658 = vadd.f32 %v1429, %v1657
    %v1659 = vpop.f32.mrf.mxu0
    %v1660 = vpop.f32.mrf.mxu0
    %v1661 = vpop.f32.mrf.mxu0
    %1662 = vdwg.mxu0
    %1663 = vmatprep.subr.bf16.mxu0 0
    %1664 = vmatpush1.bf16.msra.mxu0 %v1582
    %1665 = vmatprep.subr.bf16.mxu0 0
    %1666 = vmatpush1.bf16.msra.mxu0 %v1581
    %1667 = vmatprep.subr.bf16.mxu0 0
    %1668 = vmatpush1.bf16.msra.mxu0 %v1580
    %1669 = vmatprep.subr.bf16.mxu0 0
    %1670 = vmatpush1.bf16.msra.mxu0 %v1579
    %1671 = vmatprep.subr.bf16.mxu0 0
    %1672 = vmatpush1.bf16.msra.mxu0 %v1578
    %1673 = vmatprep.subr.bf16.mxu0 0
    %1674 = vmatpush1.bf16.msra.mxu0 %v1577
    %1675 = vmatprep.subr.bf16.mxu0 0
    %1676 = vmatpush1.bf16.msra.mxu0 %v1576
    %1677 = vmatprep.subr.bf16.mxu0 0
    %1678 = vmatpush1.bf16.msra.mxu0 %v1575
    %1679 = vmatprep.subr.bf16.mxu0 0
    %1680 = vmatpush2.bf16.msra.mxu0 %v1590
    %1681 = vmatprep.subr.bf16.mxu0 0
    %1682 = vmatpush2.bf16.msra.mxu0 %v1589
    %1683 = vmatprep.subr.bf16.mxu0 0
    %1684 = vmatpush2.bf16.msra.mxu0 %v1588
    %1685 = vmatprep.subr.bf16.mxu0 0
    %1686 = vmatpush2.bf16.msra.mxu0 %v1587
    %1687 = vmatprep.subr.bf16.mxu0 0
    %1688 = vmatpush2.bf16.msra.mxu0 %v1586
    %1689 = vmatprep.subr.bf16.mxu0 0
    %1690 = vmatpush2.bf16.msra.mxu0 %v1585
    %1691 = vmatprep.subr.bf16.mxu0 0
    %1692 = vmatpush2.bf16.msra.mxu0 %v1584
    %1693 = vmatprep.subr.bf16.mxu0 0
    %1694 = vmatpush2.bf16.msra.mxu0 %v1583
    %1695 = vmatprep.mubr.bf16.mxu0 %v1359
    %1696 = vmatmul.mubr.bf16.gmra.mxu0 %v1358
    %v1697 = vpop.f32.mrf.mxu0
    %v1698 = vadd.f32 %v1658, %v1697
    %v1699 = vpop.f32.mrf.mxu0
    %v1700 = vpop.f32.mrf.mxu0
    %v1701 = vpop.f32.mrf.mxu0
    %1702 = vdwg.mxu0
    %v1703 = vadd.f32 %v1698, %v92
    %1704 = vst [vmem:[#allocation11] sm:$0xff] %v1703
    // Predicated region
    $region50: #{tpu_custom_call.1} parent=1 // pred_check
      _
    $region51: #{tpu_custom_call.1} parent=1 // pred_check_branch
      %1706 = sbr.rel (0) target = $region53
    $region52: #{tpu_custom_call.1} parent=1 // pred_region
      %s1708 = ssub.s32 128, 128
      %1709 = vsyncadd [#allocation4], %s1708
      %s1711 = sshll.u32 [#allocation11], 4
      %s1712 = int_to_ptr.vmem [resolvable:$true] %s1711
      %1714 = dma.vmem_to_hbm [thread:$0]  %s1712, 128, %s7, [#allocation4]
    $region53: #{tpu_custom_call.1} parent=1 // pred_fallthru
      _
    // Predicated region
    $region54: #{tpu_custom_call.1} parent=1 // pred_check
      _
    $region55: #{tpu_custom_call.1} parent=1 // pred_check_branch
      %1716 = sbr.rel (0) target = $region57
    $region56: #{tpu_custom_call.1} parent=1 // pred_region
      %1717 = dma.done [#allocation4], 128
    $region57: #{tpu_custom_call.1} parent=1 // pred_fallthru
      _
    %1718 = vsyncpa [#allocation3], 1
    %1719 = vsyncpa [#allocation6], 1
    %1720 = vsyncpa [#allocation9], 1
    %1721 = vsyncpa [#allocation4], 1

</llo_original>
